<compile_context>
chip_gen: v5e
topology: v5e:2x2
jax: 0.10.0
libtpu: 0.0.40
codegen_flags: <defaults>
</compile_context>

<pallas_src>
import jax
import jax.numpy as jnp
from jax.experimental import pallas as pl
from jax.experimental.pallas import tpu as pltpu


def _round_up(a, b):
    return (a + b - 1) // b * b


def _choose_tile_h(h_out, w_out, target_m):
    """Largest tile_h dividing h_out with (tile_h*w_out) % 8 == 0 and
    tile_h*w_out <= target_m; falls back to the smallest legal tile."""
    cands = [th for th in range(1, h_out + 1)
             if h_out % th == 0 and ((th * w_out) % 8 == 0 or th == h_out)]
    under = [th for th in cands if th * w_out <= target_m]
    return max(under) if under else min(cands)


def _make_kernel(k, stride, c_in, k_total, k_pad, tile_h, w_out, tile_m, tile_n):
    """Fused im2col + single-dot conv + BN-shift + ReLU kernel."""

    def kernel(x_ref, w_ref, shift_ref, o_ref, col_ref):
        # x_ref:     (1, H_pad, W_pad, C_in)   whole padded image (resident per image)
        # w_ref:     (K_pad, tile_n)           BN-scale-folded, im2col-ordered weights
        # shift_ref: (1, tile_n)               BN shift (f32)
        # o_ref:     (1, tile_m, tile_n)       flattened-M output row block (lane-dense)
        # col_ref:   (tile_m, K_pad)           VMEM im2col scratch (lane-dense)
        r = pl.program_id(2)
        row0 = pl.multiple_of(r * (tile_h * stride), tile_h * stride)

        # Zero the K padding tail so uninitialized VMEM can never poison the dot
        # (the matching weight rows are zero, but NaN * 0 = NaN).
        if k_total < k_pad:
            col_ref[:, k_total:] = jnp.zeros((tile_m, k_pad - k_total),
                                             col_ref.dtype)

        # Fused im2col: k*k shifted views of the VMEM-resident input, packed into
        # one lane-dense scratch.  The image is DMA'd from HBM only once.
        for ky in range(k):
            for kx in range(k):
                if stride == 1:
                    patch = x_ref[0, pl.ds(row0 + ky, tile_h), kx:kx + w_out, :]
                else:
                    # TODO(synk): stride>1 strided-ref slicing is not exercised
                    # by the test below.
                    patch = x_ref[0, pl.ds(row0 + ky, tile_h, stride),
                                  pl.ds(kx, w_out, stride), :]
                tap = ky * k + kx
                col_ref[:, tap * c_in:(tap + 1) * c_in] = patch.reshape(tile_m, c_in)

        # Single MXU contraction over the full K = k*k*C_in (padded to K_pad).
        acc = jnp.dot(col_ref[...], w_ref[...], preferred_element_type=jnp.float32)

        # BN shift (scale already folded into weights) + ReLU; lane-dense store.
        o_ref[0] = jnp.maximum(acc + shift_ref[...], 0.0).astype(o_ref.dtype)

    return kernel


def conv_module_forward(x_nchw, weight, gamma, beta, running_mean, running_var,
                        *, stride=1, padding=0, eps=1e-5,
                        compute_dtype=jnp.float32, tile_n=None,
                        tile_m_target=512):
    """ConvModule forward: Conv2d(no bias) -> BatchNorm2d(eval) -> ReLU (NCHW)."""
    n, c_in, h, w = x_nchw.shape
    c_out, c_in_w, kh, kw = weight.shape
    assert c_in == c_in_w and kh == kw, "square kernel, groups=1 only"
    k = kh

    h_out = (h + 2 * padding - k) // stride + 1
    w_out = (w + 2 * padding - k) // stride + 1
    m_total = h_out * w_out

    # ---- tile choices -------------------------------------------------------
    if tile_n is None:
        tile_n = 256 if c_out >= 256 else 128
    c_out_pad = _round_up(max(c_out, tile_n), tile_n)
    tile_h = _choose_tile_h(h_out, w_out, tile_m_target)
    tile_m = tile_h * w_out
    n_r = h_out // tile_h

    k_total = k * k * c_in
    k_pad = _round_up(k_total, 128)            # lane-dense im2col / real MXU K

    # ---- wrapper-side glue (layout only, no k*k activation inflation) ------
    x_nhwc = jnp.transpose(x_nchw, (0, 2, 3, 1))
    xp = jnp.pad(x_nhwc, ((0, 0), (padding, padding), (padding, padding), (0, 0)))
    xp = xp.astype(compute_dtype)
    h_pad, w_pad = xp.shape[1], xp.shape[2]

    # Fold BN (inference) scale into the weights; keep only a per-channel shift.
    scale = gamma / jnp.sqrt(running_var + eps)                # (C_out,)
    shift = beta - running_mean * scale                        # (C_out,)
    w2d = jnp.transpose(weight, (2, 3, 1, 0)).reshape(k_total, c_out) * scale
    w2d = jnp.pad(w2d, ((0, k_pad - k_total), (0, c_out_pad - c_out)))
    w2d = w2d.astype(compute_dtype)
    shift_p = jnp.pad(shift, (0, c_out_pad - c_out)).reshape(1, c_out_pad)
    shift_p = shift_p.astype(jnp.float32)

    out_dtype = jnp.dtype(compute_dtype)       # bf16 compute -> bf16 writeback

    # ---- VMEM budget from tiled/(8,128)-padded footprints -------------------
    itemsize = jnp.dtype(compute_dtype).itemsize
    in_block = h_pad * _round_up(w_pad, 8) * _round_up(c_in, 128) * itemsize
    w_block = _round_up(k_pad, 8) * tile_n * itemsize
    shift_block = 8 * tile_n * 4
    out_block = _round_up(tile_m, 8) * tile_n * out_dtype.itemsize
    col_block = _round_up(tile_m, 8) * k_pad * itemsize
    vmem_need = 2 * (in_block + w_block + shift_block + out_block) + col_block
    try:
        cap = pltpu.get_tpu_info().vmem_capacity_bytes
        vmem_cap = (48 << 20) if cap >= (96 << 20) else (36 << 20)
    except Exception:                           # pragma: no cover - defensive
        vmem_cap = 36 << 20
    vmem_limit = int(min(max(int(1.5 * vmem_need), 4 << 20), vmem_cap))

    # ---- grid: keep the larger operand resident across the other axis -------
    n_j = c_out_pad // tile_n
    if w_block > in_block:
        grid = (n_j, n, n_r)                    # weights resident across batch
        x_map = lambda j, b, r: (b, 0, 0, 0)
        w_map = lambda j, b, r: (0, j)
        s_map = lambda j, b, r: (0, j)
        o_map = lambda j, b, r: (b, r, j)
    else:
        grid = (n, n_j, n_r)                    # image resident across C_out tiles
        x_map = lambda b, j, r: (b, 0, 0, 0)
        w_map = lambda b, j, r: (0, j)
        s_map = lambda b, j, r: (0, j)
        o_map = lambda b, j, r: (b, r, j)

    kernel = _make_kernel(k, stride, c_in, k_total, k_pad,
                          tile_h, w_out, tile_m, tile_n)

    out = pl.pallas_call(
        kernel,
        out_shape=jax.ShapeDtypeStruct((n, m_total, c_out_pad), out_dtype),
        grid_spec=pltpu.PrefetchScalarGridSpec(
            num_scalar_prefetch=0,
            grid=grid,
            in_specs=[
                pl.BlockSpec((1, h_pad, w_pad, c_in), x_map),
                pl.BlockSpec((k_pad, tile_n), w_map),
                pl.BlockSpec((1, tile_n), s_map),
            ],
            out_specs=pl.BlockSpec((1, tile_m, tile_n), o_map),
            scratch_shapes=[pltpu.VMEM((tile_m, k_pad), compute_dtype)],
        ),
        compiler_params=pltpu.CompilerParams(
            dimension_semantics=("parallel", "parallel", "parallel"),
            vmem_limit_bytes=vmem_limit,
        ),
    )(xp, w2d, shift_p)

    # Layout glue back to the PyTorch contract (NCHW, real C_out).
    out = out.reshape(n, h_out, w_out, c_out_pad)[..., :c_out]
    return jnp.transpose(out, (0, 3, 1, 2))


def _reference(x_nchw, weight, gamma, beta, running_mean, running_var,
               *, stride, padding, eps=1e-5):
    y = jax.lax.conv_general_dilated(
        x_nchw, weight,
        window_strides=(stride, stride),
        padding=[(padding, padding), (padding, padding)],
        dimension_numbers=("NCHW", "OIHW", "NCHW"))
    scale = gamma / jnp.sqrt(running_var + eps)
    shift = beta - running_mean * scale
    y = y * scale[None, :, None, None] + shift[None, :, None, None]
    return jnp.maximum(y, 0.0)


if __name__ == "__main__":
    # ConvModule(in_channels=4, out_channels=8, kernel_size=3, stride=1,
    #            padding=1, norm_cfg={'type': 'BN'}, act_cfg={'type': 'ReLU'})
    N, C_IN, H, W = 2, 4, 16, 16
    C_OUT, K, STRIDE, PAD = 8, 3, 1, 1

    key = jax.random.PRNGKey(0)
    kx_, kw_, kg, kb, km, kv = jax.random.split(key, 6)

    x = jax.random.normal(kx_, (N, C_IN, H, W), dtype=jnp.float32)
    weight = jax.random.normal(kw_, (C_OUT, C_IN, K, K), dtype=jnp.float32) * 0.1
    gamma = 1.0 + 0.1 * jax.random.normal(kg, (C_OUT,), dtype=jnp.float32)
    beta = 0.1 * jax.random.normal(kb, (C_OUT,), dtype=jnp.float32)
    running_mean = 0.05 * jax.random.normal(km, (C_OUT,), dtype=jnp.float32)
    running_var = 1.0 + 0.1 * jax.random.uniform(kv, (C_OUT,), dtype=jnp.float32)

    ref = _reference(x, weight, gamma, beta, running_mean, running_var,
                     stride=STRIDE, padding=PAD)

    # f32 compute, single row block per image.
    out_f32 = conv_module_forward(
        x, weight, gamma, beta, running_mean, running_var,
        stride=STRIDE, padding=PAD, compute_dtype=jnp.float32)
    out_f32 = jax.block_until_ready(out_f32)
    assert out_f32.shape == (N, C_OUT, H, W), out_f32.shape
    assert jnp.allclose(out_f32, ref, atol=5e-4, rtol=5e-4), \
        float(jnp.max(jnp.abs(out_f32 - ref)))

    # f32 compute, forced multi-row-block path (exercises the M-tiling grid axis).
    out_tiled = conv_module_forward(
        x, weight, gamma, beta, running_mean, running_var,
        stride=STRIDE, padding=PAD, compute_dtype=jnp.float32, tile_m_target=128)
    out_tiled = jax.block_until_ready(out_tiled)
    assert out_tiled.shape == (N, C_OUT, H, W), out_tiled.shape
    assert jnp.allclose(out_tiled, ref, atol=5e-4, rtol=5e-4), \
        float(jnp.max(jnp.abs(out_tiled - ref)))

    # bf16 matmul operands + bf16 writeback (f32 accumulation via
    # preferred_element_type). Looser tolerance.
    out_bf16 = conv_module_forward(
        x, weight, gamma, beta, running_mean, running_var,
        stride=STRIDE, padding=PAD, compute_dtype=jnp.bfloat16)
    out_bf16 = jax.block_until_ready(out_bf16)
    assert out_bf16.shape == (N, C_OUT, H, W), out_bf16.shape
    assert jnp.allclose(out_bf16.astype(jnp.float32), ref, atol=5e-2, rtol=5e-2), \
        float(jnp.max(jnp.abs(out_bf16.astype(jnp.float32) - ref)))

    print("KERNEL_OK")
</pallas_src>

<mosaic_0001>
module attributes {stable_mosaic.version = 11 : i64} {
  func.func @kernel(%arg0: i32, %arg1: i32, %arg2: i32, %arg3: memref<1x18x18x4xf32, #tpu.memory_space<vmem>>, %arg4: memref<128x128xf32, #tpu.memory_space<vmem>>, %arg5: memref<1x128xf32, #tpu.memory_space<vmem>>, %arg6: memref<1x256x128xf32, #tpu.memory_space<vmem>>, %arg7: memref<256x128xf32, #tpu.memory_space<vmem>>) attributes {dimension_semantics = [#tpu.dimension_semantics<parallel>, #tpu.dimension_semantics<parallel>, #tpu.dimension_semantics<parallel>], iteration_bounds = array<i64: 2, 1, 1>, scalar_prefetch = 0 : i64, scratch_operands = 1 : i64, tpu.core_type = #tpu.core_type<tc>, window_params = [{transform_indices = @transform_0, window_bounds = array<i64: 1, 18, 18, 4>}, {transform_indices = @transform_1, window_bounds = array<i64: 128, 128>}, {transform_indices = @transform_2, window_bounds = array<i64: 1, 128>}, {transform_indices = @transform_3, window_bounds = array<i64: 1, 256, 128>}]} {
    %c16_i32 = arith.constant 16 : i32
    %0 = arith.muli %arg2, %c16_i32 : i32
    %1 = tpu.assume_multiple %0, 16 : i32
    %cst = arith.constant 0.000000e+00 : f32
    %2 = vector.broadcast %cst : f32 to vector<256x92xf32>
    %c0 = arith.constant 0 : index
    %c36 = arith.constant 36 : index
    %3 = vector.load %arg7[%c0, %c36] : memref<256x128xf32, #tpu.memory_space<vmem>>, vector<256x92xf32>
    tpu.vector_store %arg7[%c0, %c36], %2 {strides = array<i32>} : memref<256x128xf32, #tpu.memory_space<vmem>>, vector<256x92xf32>,
    %c0_i32 = arith.constant 0 : i32
    %4 = arith.addi %1, %c0_i32 : i32
    %c0_0 = arith.constant 0 : index
    %5 = arith.index_cast %4 : i32 to index
    %c0_1 = arith.constant 0 : index
    %c0_2 = arith.constant 0 : index
    %6 = vector.load %arg3[%c0_0, %5, %c0_1, %c0_2] : memref<1x18x18x4xf32, #tpu.memory_space<vmem>>, vector<1x16x16x4xf32>
    %7 = vector.shape_cast %6 : vector<1x16x16x4xf32> to vector<16x16x4xf32>
    %8 = vector.shape_cast %7 : vector<16x16x4xf32> to vector<256x4xf32>
    %c0_3 = arith.constant 0 : index
    %c0_4 = arith.constant 0 : index
    %9 = vector.load %arg7[%c0_3, %c0_4] : memref<256x128xf32, #tpu.memory_space<vmem>>, vector<256x4xf32>
    tpu.vector_store %arg7[%c0_3, %c0_4], %8 {strides = array<i32>} : memref<256x128xf32, #tpu.memory_space<vmem>>, vector<256x4xf32>,
    %c0_i32_5 = arith.constant 0 : i32
    %10 = arith.addi %1, %c0_i32_5 : i32
    %c0_6 = arith.constant 0 : index
    %11 = arith.index_cast %10 : i32 to index
    %c1 = arith.constant 1 : index
    %c0_7 = arith.constant 0 : index
    %12 = vector.load %arg3[%c0_6, %11, %c1, %c0_7] : memref<1x18x18x4xf32, #tpu.memory_space<vmem>>, vector<1x16x16x4xf32>
    %13 = vector.shape_cast %12 : vector<1x16x16x4xf32> to vector<16x16x4xf32>
    %14 = vector.shape_cast %13 : vector<16x16x4xf32> to vector<256x4xf32>
    %c0_8 = arith.constant 0 : index
    %c4 = arith.constant 4 : index
    %15 = vector.load %arg7[%c0_8, %c4] : memref<256x128xf32, #tpu.memory_space<vmem>>, vector<256x4xf32>
    tpu.vector_store %arg7[%c0_8, %c4], %14 {strides = array<i32>} : memref<256x128xf32, #tpu.memory_space<vmem>>, vector<256x4xf32>,
    %c0_i32_9 = arith.constant 0 : i32
    %16 = arith.addi %1, %c0_i32_9 : i32
    %c0_10 = arith.constant 0 : index
    %17 = arith.index_cast %16 : i32 to index
    %c2 = arith.constant 2 : index
    %c0_11 = arith.constant 0 : index
    %18 = vector.load %arg3[%c0_10, %17, %c2, %c0_11] : memref<1x18x18x4xf32, #tpu.memory_space<vmem>>, vector<1x16x16x4xf32>
    %19 = vector.shape_cast %18 : vector<1x16x16x4xf32> to vector<16x16x4xf32>
    %20 = vector.shape_cast %19 : vector<16x16x4xf32> to vector<256x4xf32>
    %c0_12 = arith.constant 0 : index
    %c8 = arith.constant 8 : index
    %21 = vector.load %arg7[%c0_12, %c8] : memref<256x128xf32, #tpu.memory_space<vmem>>, vector<256x4xf32>
    tpu.vector_store %arg7[%c0_12, %c8], %20 {strides = array<i32>} : memref<256x128xf32, #tpu.memory_space<vmem>>, vector<256x4xf32>,
    %c1_i32 = arith.constant 1 : i32
    %22 = arith.addi %1, %c1_i32 : i32
    %c0_13 = arith.constant 0 : index
    %23 = arith.index_cast %22 : i32 to index
    %c0_14 = arith.constant 0 : index
    %c0_15 = arith.constant 0 : index
    %24 = vector.load %arg3[%c0_13, %23, %c0_14, %c0_15] : memref<1x18x18x4xf32, #tpu.memory_space<vmem>>, vector<1x16x16x4xf32>
    %25 = vector.shape_cast %24 : vector<1x16x16x4xf32> to vector<16x16x4xf32>
    %26 = vector.shape_cast %25 : vector<16x16x4xf32> to vector<256x4xf32>
    %c0_16 = arith.constant 0 : index
    %c12 = arith.constant 12 : index
    %27 = vector.load %arg7[%c0_16, %c12] : memref<256x128xf32, #tpu.memory_space<vmem>>, vector<256x4xf32>
    tpu.vector_store %arg7[%c0_16, %c12], %26 {strides = array<i32>} : memref<256x128xf32, #tpu.memory_space<vmem>>, vector<256x4xf32>,
    %c1_i32_17 = arith.constant 1 : i32
    %28 = arith.addi %1, %c1_i32_17 : i32
    %c0_18 = arith.constant 0 : index
    %29 = arith.index_cast %28 : i32 to index
    %c1_19 = arith.constant 1 : index
    %c0_20 = arith.constant 0 : index
    %30 = vector.load %arg3[%c0_18, %29, %c1_19, %c0_20] : memref<1x18x18x4xf32, #tpu.memory_space<vmem>>, vector<1x16x16x4xf32>
    %31 = vector.shape_cast %30 : vector<1x16x16x4xf32> to vector<16x16x4xf32>
    %32 = vector.shape_cast %31 : vector<16x16x4xf32> to vector<256x4xf32>
    %c0_21 = arith.constant 0 : index
    %c16 = arith.constant 16 : index
    %33 = vector.load %arg7[%c0_21, %c16] : memref<256x128xf32, #tpu.memory_space<vmem>>, vector<256x4xf32>
    tpu.vector_store %arg7[%c0_21, %c16], %32 {strides = array<i32>} : memref<256x128xf32, #tpu.memory_space<vmem>>, vector<256x4xf32>,
    %c1_i32_22 = arith.constant 1 : i32
    %34 = arith.addi %1, %c1_i32_22 : i32
    %c0_23 = arith.constant 0 : index
    %35 = arith.index_cast %34 : i32 to index
    %c2_24 = arith.constant 2 : index
    %c0_25 = arith.constant 0 : index
    %36 = vector.load %arg3[%c0_23, %35, %c2_24, %c0_25] : memref<1x18x18x4xf32, #tpu.memory_space<vmem>>, vector<1x16x16x4xf32>
    %37 = vector.shape_cast %36 : vector<1x16x16x4xf32> to vector<16x16x4xf32>
    %38 = vector.shape_cast %37 : vector<16x16x4xf32> to vector<256x4xf32>
    %c0_26 = arith.constant 0 : index
    %c20 = arith.constant 20 : index
    %39 = vector.load %arg7[%c0_26, %c20] : memref<256x128xf32, #tpu.memory_space<vmem>>, vector<256x4xf32>
    tpu.vector_store %arg7[%c0_26, %c20], %38 {strides = array<i32>} : memref<256x128xf32, #tpu.memory_space<vmem>>, vector<256x4xf32>,
    %c2_i32 = arith.constant 2 : i32
    %40 = arith.addi %1, %c2_i32 : i32
    %c0_27 = arith.constant 0 : index
    %41 = arith.index_cast %40 : i32 to index
    %c0_28 = arith.constant 0 : index
    %c0_29 = arith.constant 0 : index
    %42 = vector.load %arg3[%c0_27, %41, %c0_28, %c0_29] : memref<1x18x18x4xf32, #tpu.memory_space<vmem>>, vector<1x16x16x4xf32>
    %43 = vector.shape_cast %42 : vector<1x16x16x4xf32> to vector<16x16x4xf32>
    %44 = vector.shape_cast %43 : vector<16x16x4xf32> to vector<256x4xf32>
    %c0_30 = arith.constant 0 : index
    %c24 = arith.constant 24 : index
    %45 = vector.load %arg7[%c0_30, %c24] : memref<256x128xf32, #tpu.memory_space<vmem>>, vector<256x4xf32>
    tpu.vector_store %arg7[%c0_30, %c24], %44 {strides = array<i32>} : memref<256x128xf32, #tpu.memory_space<vmem>>, vector<256x4xf32>,
    %c2_i32_31 = arith.constant 2 : i32
    %46 = arith.addi %1, %c2_i32_31 : i32
    %c0_32 = arith.constant 0 : index
    %47 = arith.index_cast %46 : i32 to index
    %c1_33 = arith.constant 1 : index
    %c0_34 = arith.constant 0 : index
    %48 = vector.load %arg3[%c0_32, %47, %c1_33, %c0_34] : memref<1x18x18x4xf32, #tpu.memory_space<vmem>>, vector<1x16x16x4xf32>
    %49 = vector.shape_cast %48 : vector<1x16x16x4xf32> to vector<16x16x4xf32>
    %50 = vector.shape_cast %49 : vector<16x16x4xf32> to vector<256x4xf32>
    %c0_35 = arith.constant 0 : index
    %c28 = arith.constant 28 : index
    %51 = vector.load %arg7[%c0_35, %c28] : memref<256x128xf32, #tpu.memory_space<vmem>>, vector<256x4xf32>
    tpu.vector_store %arg7[%c0_35, %c28], %50 {strides = array<i32>} : memref<256x128xf32, #tpu.memory_space<vmem>>, vector<256x4xf32>,
    %c2_i32_36 = arith.constant 2 : i32
    %52 = arith.addi %1, %c2_i32_36 : i32
    %c0_37 = arith.constant 0 : index
    %53 = arith.index_cast %52 : i32 to index
    %c2_38 = arith.constant 2 : index
    %c0_39 = arith.constant 0 : index
    %54 = vector.load %arg3[%c0_37, %53, %c2_38, %c0_39] : memref<1x18x18x4xf32, #tpu.memory_space<vmem>>, vector<1x16x16x4xf32>
    %55 = vector.shape_cast %54 : vector<1x16x16x4xf32> to vector<16x16x4xf32>
    %56 = vector.shape_cast %55 : vector<16x16x4xf32> to vector<256x4xf32>
    %c0_40 = arith.constant 0 : index
    %c32 = arith.constant 32 : index
    %57 = vector.load %arg7[%c0_40, %c32] : memref<256x128xf32, #tpu.memory_space<vmem>>, vector<256x4xf32>
    tpu.vector_store %arg7[%c0_40, %c32], %56 {strides = array<i32>} : memref<256x128xf32, #tpu.memory_space<vmem>>, vector<256x4xf32>,
    %c0_41 = arith.constant 0 : index
    %c0_42 = arith.constant 0 : index
    %58 = vector.load %arg7[%c0_41, %c0_42] : memref<256x128xf32, #tpu.memory_space<vmem>>, vector<256x128xf32>
    %c0_43 = arith.constant 0 : index
    %c0_44 = arith.constant 0 : index
    %59 = vector.load %arg4[%c0_43, %c0_44] : memref<128x128xf32, #tpu.memory_space<vmem>>, vector<128x128xf32>
    %cst_45 = arith.constant dense<0.000000e+00> : vector<256x128xf32>
    %60 = tpu.matmul %58, %59, %cst_45 {dimension_numbers = #tpu.dot_dimension_numbers<[1], [0], [0], [1], [0, 0, 1, 1], [], []>} : vector<256x128xf32>, vector<128x128xf32>, vector<256x128xf32> -> vector<256x128xf32>
    %c0_46 = arith.constant 0 : index
    %c0_47 = arith.constant 0 : index
    %61 = vector.load %arg5[%c0_46, %c0_47] : memref<1x128xf32, #tpu.memory_space<vmem>>, vector<1x128xf32>
    %62 = vector.broadcast %61 : vector<1x128xf32> to vector<256x128xf32>
    %63 = arith.addf %60, %62 : vector<256x128xf32>
    %cst_48 = arith.constant 0.000000e+00 : f32
    %64 = vector.broadcast %cst_48 : f32 to vector<256x128xf32>
    %65 = arith.maximumf %63, %64 : vector<256x128xf32>
    %c0_49 = arith.constant 0 : index
    %c0_50 = arith.constant 0 : index
    %c0_51 = arith.constant 0 : index
    %66 = vector.load %arg6[%c0_49, %c0_50, %c0_51] : memref<1x256x128xf32, #tpu.memory_space<vmem>>, vector<1x256x128xf32>
    %67 = vector.shape_cast %66 : vector<1x256x128xf32> to vector<256x128xf32>
    %68 = vector.shape_cast %65 : vector<256x128xf32> to vector<1x256x128xf32>
    tpu.vector_store %arg6[%c0_49, %c0_50, %c0_51], %68 {strides = array<i32>} : memref<1x256x128xf32, #tpu.memory_space<vmem>>, vector<1x256x128xf32>,
    return
  }
  func.func @transform_0(%arg0: i32, %arg1: i32, %arg2: i32) -> (i32, i32, i32, i32) {
    %c0_i32 = arith.constant 0 : i32
    %c0_i32_0 = arith.constant 0 : i32
    %c0_i32_1 = arith.constant 0 : i32
    %c0_i32_2 = arith.constant 0 : i32
    return %arg0, %c0_i32, %c0_i32_0, %c0_i32_1 : i32, i32, i32, i32
  }
  func.func @transform_1(%arg0: i32, %arg1: i32, %arg2: i32) -> (i32, i32) {
    %c0_i32 = arith.constant 0 : i32
    %c0_i32_0 = arith.constant 0 : i32
    return %c0_i32, %arg1 : i32, i32
  }
  func.func @transform_2(%arg0: i32, %arg1: i32, %arg2: i32) -> (i32, i32) {
    %c0_i32 = arith.constant 0 : i32
    %c0_i32_0 = arith.constant 0 : i32
    return %c0_i32, %arg1 : i32, i32
  }
  func.func @transform_3(%arg0: i32, %arg1: i32, %arg2: i32) -> (i32, i32, i32) {
    %c0_i32 = arith.constant 0 : i32
    return %arg0, %arg2, %arg1 : i32, i32, i32
  }
}

</mosaic_0001>

<llo_original>
// kernel: tpu_custom_call.1
$region0: #{tpu_custom_call.1}
  #allocation0 [shape = 'u32[]', space=smem, size = 0x4, offset = 0x4, fixed_abs, tag = 'smem constant byte address 0x4 - core index']
  #allocation1 [shape = 'u32[72,128]{1,0:T(1,128)}', space=vmem, size = 0x9000, scoped, tag = 'internal scratch']
  #allocation2 [shape = 'f32[256,128]{1,0:T(8,128)}', space=vmem, size = 0x20000, scoped, tag = 'scratch operand']
  %s0 = inlined_call_operand.vmem [shape: f32[2,18,18,4], index: 0, kind: input, shape index: {}]
  %s1 = inlined_call_operand.vmem [shape: f32[128,128], index: 1, kind: input, shape index: {}]
  %s2 = inlined_call_operand.vmem [shape: f32[1,128], index: 2, kind: input, shape index: {}]
  %s3 = inlined_call_operand.hbm [shape: f32[2,256,128], index: 3, kind: output, shape index: {}]
  %s4 = sld [smem:[#allocation0]]
  $region45: #{tpu_custom_call.1} parent=0
    _
  %s6 = ssub.s32 1, %s4
  %s7 = scalar_select 0, %s6, %s4
  $region1: #{tpu_custom_call.1} parent=0
    #allocation3 [shape = 'u8[262144]{0}', space=vmem, size = 0x40000, scoped, tag = 'output window, operand 0']
    #allocation4 [shape = 's32[2]{0}', space=sflag, size = 0x8, scoped, tag = 'scoped memory for tpu_custom_call.1']
    %8 = vsyncpa [#allocation4], 0
    %s9 = scalar_lea.sflag [#allocation4], 1
    %10 = vsyncpa %s9, 0
    loop: start=0, step=1, limit=4
    $region2: #{tpu_custom_call.1} parent=1 // loop_pre_header
      _
    $region3: #{tpu_custom_call.1} parent=1 // loop_header
      %s12 = sphi 0, %s16
      %p13 = scmp.ge.s32.totalorder %s12, 4
      %s19 = sphi 0, %s38
      %s20 = sphi 0, %s34
      %s21 = sphi 0, %s30
      %s22 = sphi 0, %s19
      %s23 = sphi 0, %s20
      %s24 = sphi 0, %s21
      %s25 = sphi 0, %s22
      %s26 = sphi 0, %s23
      %s27 = sphi 0, %s24
      %s41 = sphi 0, %s43
      %s44 = sphi 0, %s41
      %s45 = sphi 0, %s44
      %s61 = sphi 0, %s45
      %s67 = sphi 0, %s69
      %s70 = sphi 0, %s67
      %s71 = sphi 0, %s70
      %s87 = sphi 0, %s71
      %s93 = sphi 0, %s95
      %s96 = sphi 0, %s93
      %s97 = sphi 0, %s96
      %s113 = sphi 0, %s97
      %s123 = sphi 0, %s125
      %s126 = sphi 0, %s123
      %s127 = sphi 0, %s126
      %s143 = sphi 0, %s127
    $region4: #{tpu_custom_call.1} parent=1 // loop_header_branch
      %15 = sbr.rel (%p13) target = $region8
    $region5: #{tpu_custom_call.1} parent=1 // loop_body
      %s17 = ssub.s32 %s12, 1
      %s18 = ssub.s32 %s12, 2
      %s28 = sadd.s32 1, %s21
      %p29 = scmp.ge.s32.totalorder %s28, 1
      %s30 = scalar_select %p29, 0, %s28
      %s31 = sadd.s32 1, %s20
      %s32 = scalar_select %p29, %s31, %s20
      %p33 = scmp.ge.s32.totalorder %s32, 1
      %s34 = scalar_select %p33, 0, %s32
      %s35 = sadd.s32 1, %s19
      %s36 = scalar_select %p33, %s35, %s19
      %p37 = scmp.ge.s32.totalorder %s36, 2
      %s38 = scalar_select %p37, 0, %s36
      %s39 = ssub.s32 %s19, %s38
      %p40 = scmp.eq.s32.totalorder %s39, 0
      %s42 = sadd.s32 %s41, 1
      %s43 = scalar_select %p40, %s41, %s42
      %p46 = pneg %p40
      %p47 = scmp.eq.s32.totalorder %s12, 1
      %p48 = por %p46, %p47
      %p49 = scmp.ne.s32.totalorder %s41, %s44
      %p50 = scmp.eq.s32.totalorder %s12, 0
      %p51 = por %p49, %p50
      %p52 = scmp.ne.s32.totalorder %s41, %s44
      %p53 = scmp.eq.s32.totalorder %s17, 1
      %p54 = por %p52, %p53
      %p55 = scmp.ne.s32.totalorder %s44, %s45
      %p56 = scmp.eq.s32.totalorder %s17, 0
      %p57 = por %p55, %p56
      %p58 = scmp.ne.s32.totalorder %s44, %s45
      %p59 = scmp.eq.s32.totalorder %s18, 1
      %p60 = por %p58, %p59
      %p62 = scmp.ne.s32.totalorder %s45, %s61
      %p63 = scmp.eq.s32.totalorder %s18, 0
      %p64 = por %p62, %p63
      %s65 = ssub.s32 %s20, %s34
      %p66 = scmp.eq.s32.totalorder %s65, 0
      %s68 = sadd.s32 %s67, 1
      %s69 = scalar_select %p66, %s67, %s68
      %p72 = pneg %p66
      %p73 = scmp.eq.s32.totalorder %s12, 1
      %p74 = por %p72, %p73
      %p75 = scmp.ne.s32.totalorder %s67, %s70
      %p76 = scmp.eq.s32.totalorder %s12, 0
      %p77 = por %p75, %p76
      %p78 = scmp.ne.s32.totalorder %s67, %s70
      %p79 = scmp.eq.s32.totalorder %s17, 1
      %p80 = por %p78, %p79
      %p81 = scmp.ne.s32.totalorder %s70, %s71
      %p82 = scmp.eq.s32.totalorder %s17, 0
      %p83 = por %p81, %p82
      %p84 = scmp.ne.s32.totalorder %s70, %s71
      %p85 = scmp.eq.s32.totalorder %s18, 1
      %p86 = por %p84, %p85
      %p88 = scmp.ne.s32.totalorder %s71, %s87
      %p89 = scmp.eq.s32.totalorder %s18, 0
      %p90 = por %p88, %p89
      %s91 = ssub.s32 %s20, %s34
      %p92 = scmp.eq.s32.totalorder %s91, 0
      %s94 = sadd.s32 %s93, 1
      %s95 = scalar_select %p92, %s93, %s94
      %p98 = pneg %p92
      %p99 = scmp.eq.s32.totalorder %s12, 1
      %p100 = por %p98, %p99
      %p101 = scmp.ne.s32.totalorder %s93, %s96
      %p102 = scmp.eq.s32.totalorder %s12, 0
      %p103 = por %p101, %p102
      %p104 = scmp.ne.s32.totalorder %s93, %s96
      %p105 = scmp.eq.s32.totalorder %s17, 1
      %p106 = por %p104, %p105
      %p107 = scmp.ne.s32.totalorder %s96, %s97
      %p108 = scmp.eq.s32.totalorder %s17, 0
      %p109 = por %p107, %p108
      %p110 = scmp.ne.s32.totalorder %s96, %s97
      %p111 = scmp.eq.s32.totalorder %s18, 1
      %p112 = por %p110, %p111
      %p114 = scmp.ne.s32.totalorder %s97, %s113
      %p115 = scmp.eq.s32.totalorder %s18, 0
      %p116 = por %p114, %p115
      %s117 = ssub.s32 %s19, %s38
      %s118 = ssub.s32 %s21, %s30
      %s119 = sor.u32 %s117, %s118
      %s120 = ssub.s32 %s20, %s34
      %s121 = sor.u32 %s119, %s120
      %p122 = scmp.eq.s32.totalorder %s121, 0
      %s124 = sadd.s32 %s123, 1
      %s125 = scalar_select %p122, %s123, %s124
      %p128 = pneg %p122
      %p129 = scmp.eq.s32.totalorder %s12, 1
      %p130 = por %p128, %p129
      %p131 = scmp.ne.s32.totalorder %s123, %s126
      %p132 = scmp.eq.s32.totalorder %s12, 0
      %p133 = por %p131, %p132
      %p134 = scmp.ne.s32.totalorder %s123, %s126
      %p135 = scmp.eq.s32.totalorder %s17, 1
      %p136 = por %p134, %p135
      %p137 = scmp.ne.s32.totalorder %s126, %s127
      %p138 = scmp.eq.s32.totalorder %s17, 0
      %p139 = por %p137, %p138
      %p140 = scmp.ne.s32.totalorder %s126, %s127
      %p141 = scmp.eq.s32.totalorder %s18, 1
      %p142 = por %p140, %p141
      %p144 = scmp.ne.s32.totalorder %s127, %s143
      %p145 = scmp.eq.s32.totalorder %s18, 0
      %p146 = por %p144, %p145
      %p147 = scmp.le.s32.totalorder 1, %s12
      %p148 = scmp.lt.s32.totalorder %s12, 3
      %p149 = pnand %p147, %p148
      %p150 = pneg %p149
      // Predicated region
      $region9: #{tpu_custom_call.1} parent=5 // pred_check
        _
      $region10: #{tpu_custom_call.1} parent=5 // pred_check_branch
        %152 = sbr.rel (%p149) target = $region12
      $region11: #{tpu_custom_call.1} parent=5 // pred_region
        %s153 = ssub.s32 %s12, 1
        // Predicated region
        $region13: #{tpu_custom_call.1} parent=11 // pred_check
          %p154 = pneg %p83
        $region14: #{tpu_custom_call.1} parent=11 // pred_check_branch
          %156 = sbr.rel (%p154) target = $region16
        $region15: #{tpu_custom_call.1} parent=11 // pred_region
          %p157 = scmp.lt.s32.totalorder %s23, 0
          %s158 = scalar_select %p157, %s23, 0
          %s159 = smul.addr %s158, 8
          %s160 = scalar_lea.vmem %s1, %s159
        $region16: #{tpu_custom_call.1} parent=11 // pred_fallthru
          _
        // Predicated region
        $region17: #{tpu_custom_call.1} parent=11 // pred_check
          %p161 = pneg %p109
        $region18: #{tpu_custom_call.1} parent=11 // pred_check_branch
          %163 = sbr.rel (%p161) target = $region20
        $region19: #{tpu_custom_call.1} parent=11 // pred_region
          %p164 = scmp.lt.s32.totalorder %s23, 0
          %s165 = scalar_select %p164, %s23, 0
          %s166 = scalar_lea.vmem %s2, %s165
        $region20: #{tpu_custom_call.1} parent=11 // pred_fallthru
          _
      $region12: #{tpu_custom_call.1} parent=5 // pred_fallthru
        _
      %p167 = scmp.lt.s32.totalorder %s12, 2
      // Predicated region
      $region21: #{tpu_custom_call.1} parent=5 // pred_check
        %p168 = pneg %p167
      $region22: #{tpu_custom_call.1} parent=5 // pred_check_branch
        %170 = sbr.rel (%p168) target = $region24
      $region23: #{tpu_custom_call.1} parent=5 // pred_region
        // Predicated region
        $region25: #{tpu_custom_call.1} parent=23 // pred_check
          %p171 = pneg %p51
        $region26: #{tpu_custom_call.1} parent=23 // pred_check_branch
          %173 = sbr.rel (%p171) target = $region28
        $region27: #{tpu_custom_call.1} parent=23 // pred_region
          %p174 = scmp.lt.s32.totalorder %s19, 1
          %s175 = scalar_select %p174, %s19, 1
          %s176 = smul.addr %s175, 54
          %s177 = smul.addr %s176, 8
          %s178 = scalar_lea.vmem %s0, %s177
        $region28: #{tpu_custom_call.1} parent=23 // pred_fallthru
          _
      $region24: #{tpu_custom_call.1} parent=5 // pred_fallthru
        _
      %p179 = scmp.le.s32.totalorder 1, %s12
      %p180 = scmp.lt.s32.totalorder %s12, 3
      %p181 = pnand %p179, %p180
      %p182 = pneg %p181
      // Predicated region
      $region29: #{tpu_custom_call.1} parent=5 // pred_check
        _
      $region30: #{tpu_custom_call.1} parent=5 // pred_check_branch
        %184 = sbr.rel (%p181) target = $region32
      $region31: #{tpu_custom_call.1} parent=5 // pred_region
        %s185 = ssub.s32 %s12, 1
        %p186 = scmp.lt.s32.totalorder %s22, 1
        %s187 = scalar_select %p186, %s22, 1
        %s188 = smul.addr %s187, 54
        %s189 = smul.addr %s188, 8
        %s190 = scalar_lea.vmem %s0, %s189
        %p191 = pneg %p57
        %p192 = pneg %p54
        %p193 = scmp.lt.s32.totalorder %s23, 0
        %s194 = scalar_select %p193, %s23, 0
        %s195 = smul.addr %s194, 8
        %s196 = scalar_lea.vmem %s1, %s195
        %p197 = pneg %p83
        %p198 = pneg %p80
        %p199 = scmp.lt.s32.totalorder %s23, 0
        %s200 = scalar_select %p199, %s23, 0
        %s201 = scalar_lea.vmem %s2, %s200
        %p202 = pneg %p109
        %p203 = pneg %p106
        %p204 = pneg %p139
        %p205 = pneg %p136
        %s206 = sand.u32 %s126, 1
        %s207 = scalar_lea.sflag [#allocation4], %s206
        %s208 = sand.u32 %s126, 1
        %s209 = smul.addr %s208, 256
        %s210 = scalar_lea.vmem [#allocation3], %s209
        %p211 = scmp.lt.s32.totalorder %s22, 1
        %s212 = scalar_select %p211, %s22, 1
        %s213 = smul.addr %s212, 54
        %s214 = smul.addr %s213, 8
        %s215 = scalar_lea.vmem %s0, %s214
        %p216 = scmp.lt.s32.totalorder %s23, 0
        %s217 = scalar_select %p216, %s23, 0
        %s218 = smul.addr %s217, 8
        %s219 = scalar_lea.vmem %s1, %s218
        %p220 = scmp.lt.s32.totalorder %s23, 0
        %s221 = scalar_select %p220, %s23, 0
        %s222 = scalar_lea.vmem %s2, %s221
        %s223 = smul.u32 32, %s24
        %s224 = smul.u32 %s24, 16
        %vm225 = vcmask 1047840
        %226 = vst.msk [vmem:[#allocation2] sm:$0xff] %vm225, 0.0
        %227 = vst.msk [vmem:[#allocation2 + $0x8] sm:$0xff] %vm225, 0.0
        %228 = vst.msk [vmem:[#allocation2 + $0x10] sm:$0xff] %vm225, 0.0
        %229 = vst.msk [vmem:[#allocation2 + $0x18] sm:$0xff] %vm225, 0.0
        %230 = vst.msk [vmem:[#allocation2 + $0x20] sm:$0xff] %vm225, 0.0
        %231 = vst.msk [vmem:[#allocation2 + $0x28] sm:$0xff] %vm225, 0.0
        %232 = vst.msk [vmem:[#allocation2 + $0x30] sm:$0xff] %vm225, 0.0
        %233 = vst.msk [vmem:[#allocation2 + $0x38] sm:$0xff] %vm225, 0.0
        %234 = vst.msk [vmem:[#allocation2 + $0x40] sm:$0xff] %vm225, 0.0
        %235 = vst.msk [vmem:[#allocation2 + $0x48] sm:$0xff] %vm225, 0.0
        %236 = vst.msk [vmem:[#allocation2 + $0x50] sm:$0xff] %vm225, 0.0
        %237 = vst.msk [vmem:[#allocation2 + $0x58] sm:$0xff] %vm225, 0.0
        %238 = vst.msk [vmem:[#allocation2 + $0x60] sm:$0xff] %vm225, 0.0
        %239 = vst.msk [vmem:[#allocation2 + $0x68] sm:$0xff] %vm225, 0.0
        %240 = vst.msk [vmem:[#allocation2 + $0x70] sm:$0xff] %vm225, 0.0
        %241 = vst.msk [vmem:[#allocation2 + $0x78] sm:$0xff] %vm225, 0.0
        %242 = vst.msk [vmem:[#allocation2 + $0x80] sm:$0xff] %vm225, 0.0
        %243 = vst.msk [vmem:[#allocation2 + $0x88] sm:$0xff] %vm225, 0.0
        %244 = vst.msk [vmem:[#allocation2 + $0x90] sm:$0xff] %vm225, 0.0
        %245 = vst.msk [vmem:[#allocation2 + $0x98] sm:$0xff] %vm225, 0.0
        %246 = vst.msk [vmem:[#allocation2 + $0xa0] sm:$0xff] %vm225, 0.0
        %247 = vst.msk [vmem:[#allocation2 + $0xa8] sm:$0xff] %vm225, 0.0
        %248 = vst.msk [vmem:[#allocation2 + $0xb0] sm:$0xff] %vm225, 0.0
        %249 = vst.msk [vmem:[#allocation2 + $0xb8] sm:$0xff] %vm225, 0.0
        %250 = vst.msk [vmem:[#allocation2 + $0xc0] sm:$0xff] %vm225, 0.0
        %251 = vst.msk [vmem:[#allocation2 + $0xc8] sm:$0xff] %vm225, 0.0
        %252 = vst.msk [vmem:[#allocation2 + $0xd0] sm:$0xff] %vm225, 0.0
        %253 = vst.msk [vmem:[#allocation2 + $0xd8] sm:$0xff] %vm225, 0.0
        %254 = vst.msk [vmem:[#allocation2 + $0xe0] sm:$0xff] %vm225, 0.0
        %255 = vst.msk [vmem:[#allocation2 + $0xe8] sm:$0xff] %vm225, 0.0
        %256 = vst.msk [vmem:[#allocation2 + $0xf0] sm:$0xff] %vm225, 0.0
        %257 = vst.msk [vmem:[#allocation2 + $0xf8] sm:$0xff] %vm225, 0.0
        %s258 = smul.u32 %s224, 24
        %s259 = scalar_lea.vmem %s215, %s258
        %v260 = vld [vmem:[%s259] sm:$0xff]
        %v261 = vld [vmem:[%s259 + $0x8] sm:$0xff]
        %v262 = vld [vmem:[%s259 + $0x18] sm:$0xff]
        %v263 = vld [vmem:[%s259 + $0x20] sm:$0xff]
        %v264 = vld [vmem:[%s259 + $0x30] sm:$0xff]
        %v265 = vld [vmem:[%s259 + $0x38] sm:$0xff]
        %v266 = vld [vmem:[%s259 + $0x48] sm:$0xff]
        %v267 = vld [vmem:[%s259 + $0x50] sm:$0xff]
        %v268 = vld [vmem:[%s259 + $0x60] sm:$0xff]
        %v269 = vld [vmem:[%s259 + $0x68] sm:$0xff]
        %v270 = vld [vmem:[%s259 + $0x78] sm:$0xff]
        %v271 = vld [vmem:[%s259 + $0x80] sm:$0xff]
        %v272 = vld [vmem:[%s259 + $0x90] sm:$0xff]
        %v273 = vld [vmem:[%s259 + $0x98] sm:$0xff]
        %v274 = vld [vmem:[%s259 + $0xa8] sm:$0xff]
        %v275 = vld [vmem:[%s259 + $0xb0] sm:$0xff]
        %v276 = vld [vmem:[%s259 + $0xc0] sm:$0xff]
        %v277 = vld [vmem:[%s259 + $0xc8] sm:$0xff]
        %v278 = vld [vmem:[%s259 + $0xd8] sm:$0xff]
        %v279 = vld [vmem:[%s259 + $0xe0] sm:$0xff]
        %v280 = vld [vmem:[%s259 + $0xf0] sm:$0xff]
        %v281 = vld [vmem:[%s259 + $0xf8] sm:$0xff]
        %v282 = vld [vmem:[%s259 + $0x108] sm:$0xff]
        %v283 = vld [vmem:[%s259 + $0x110] sm:$0xff]
        %v284 = vld [vmem:[%s259 + $0x120] sm:$0xff]
        %v285 = vld [vmem:[%s259 + $0x128] sm:$0xff]
        %v286 = vld [vmem:[%s259 + $0x138] sm:$0xff]
        %v287 = vld [vmem:[%s259 + $0x140] sm:$0xff]
        %v288 = vld [vmem:[%s259 + $0x150] sm:$0xff]
        %v289 = vld [vmem:[%s259 + $0x158] sm:$0xff]
        %v290 = vld [vmem:[%s259 + $0x168] sm:$0xff]
        %v291 = vld [vmem:[%s259 + $0x170] sm:$0xff]
        %vm292 = vcmask 31744
        %293 = vst.msk [vmem:[#allocation2] sm:$0xff] %vm292, %v260
        %294 = vst.msk [vmem:[#allocation2 + $0x8] sm:$0xff] %vm292, %v261
        %295 = vst.msk [vmem:[#allocation2 + $0x10] sm:$0xff] %vm292, %v262
        %296 = vst.msk [vmem:[#allocation2 + $0x18] sm:$0xff] %vm292, %v263
        %297 = vst.msk [vmem:[#allocation2 + $0x20] sm:$0xff] %vm292, %v264
        %298 = vst.msk [vmem:[#allocation2 + $0x28] sm:$0xff] %vm292, %v265
        %299 = vst.msk [vmem:[#allocation2 + $0x30] sm:$0xff] %vm292, %v266
        %300 = vst.msk [vmem:[#allocation2 + $0x38] sm:$0xff] %vm292, %v267
        %301 = vst.msk [vmem:[#allocation2 + $0x40] sm:$0xff] %vm292, %v268
        %302 = vst.msk [vmem:[#allocation2 + $0x48] sm:$0xff] %vm292, %v269
        %303 = vst.msk [vmem:[#allocation2 + $0x50] sm:$0xff] %vm292, %v270
        %304 = vst.msk [vmem:[#allocation2 + $0x58] sm:$0xff] %vm292, %v271
        %305 = vst.msk [vmem:[#allocation2 + $0x60] sm:$0xff] %vm292, %v272
        %306 = vst.msk [vmem:[#allocation2 + $0x68] sm:$0xff] %vm292, %v273
        %307 = vst.msk [vmem:[#allocation2 + $0x70] sm:$0xff] %vm292, %v274
        %308 = vst.msk [vmem:[#allocation2 + $0x78] sm:$0xff] %vm292, %v275
        %309 = vst.msk [vmem:[#allocation2 + $0x80] sm:$0xff] %vm292, %v276
        %310 = vst.msk [vmem:[#allocation2 + $0x88] sm:$0xff] %vm292, %v277
        %311 = vst.msk [vmem:[#allocation2 + $0x90] sm:$0xff] %vm292, %v278
        %312 = vst.msk [vmem:[#allocation2 + $0x98] sm:$0xff] %vm292, %v279
        %313 = vst.msk [vmem:[#allocation2 + $0xa0] sm:$0xff] %vm292, %v280
        %314 = vst.msk [vmem:[#allocation2 + $0xa8] sm:$0xff] %vm292, %v281
        %315 = vst.msk [vmem:[#allocation2 + $0xb0] sm:$0xff] %vm292, %v282
        %316 = vst.msk [vmem:[#allocation2 + $0xb8] sm:$0xff] %vm292, %v283
        %317 = vst.msk [vmem:[#allocation2 + $0xc0] sm:$0xff] %vm292, %v284
        %318 = vst.msk [vmem:[#allocation2 + $0xc8] sm:$0xff] %vm292, %v285
        %319 = vst.msk [vmem:[#allocation2 + $0xd0] sm:$0xff] %vm292, %v286
        %320 = vst.msk [vmem:[#allocation2 + $0xd8] sm:$0xff] %vm292, %v287
        %321 = vst.msk [vmem:[#allocation2 + $0xe0] sm:$0xff] %vm292, %v288
        %322 = vst.msk [vmem:[#allocation2 + $0xe8] sm:$0xff] %vm292, %v289
        %323 = vst.msk [vmem:[#allocation2 + $0xf0] sm:$0xff] %vm292, %v290
        %324 = vst.msk [vmem:[#allocation2 + $0xf8] sm:$0xff] %vm292, %v291
        %v325 = vld [vmem:[%s259 + $0x1] sm:$0xff]
        %v326 = vld [vmem:[%s259 + $0x9] sm:$0xff]
        %v327 = vld [vmem:[%s259 + $0x19] sm:$0xff]
        %v328 = vld [vmem:[%s259 + $0x21] sm:$0xff]
        %v329 = vld [vmem:[%s259 + $0x31] sm:$0xff]
        %v330 = vld [vmem:[%s259 + $0x39] sm:$0xff]
        %v331 = vld [vmem:[%s259 + $0x49] sm:$0xff]
        %v332 = vld [vmem:[%s259 + $0x51] sm:$0xff]
        %v333 = vld [vmem:[%s259 + $0x61] sm:$0xff]
        %v334 = vld [vmem:[%s259 + $0x69] sm:$0xff]
        %v335 = vld [vmem:[%s259 + $0x79] sm:$0xff]
        %v336 = vld [vmem:[%s259 + $0x81] sm:$0xff]
        %v337 = vld [vmem:[%s259 + $0x91] sm:$0xff]
        %v338 = vld [vmem:[%s259 + $0x99] sm:$0xff]
        %v339 = vld [vmem:[%s259 + $0xa9] sm:$0xff]
        %v340 = vld [vmem:[%s259 + $0xb1] sm:$0xff]
        %v341 = vld [vmem:[%s259 + $0xc1] sm:$0xff]
        %v342 = vld [vmem:[%s259 + $0xc9] sm:$0xff]
        %v343 = vld [vmem:[%s259 + $0xd9] sm:$0xff]
        %v344 = vld [vmem:[%s259 + $0xe1] sm:$0xff]
        %v345 = vld [vmem:[%s259 + $0xf1] sm:$0xff]
        %v346 = vld [vmem:[%s259 + $0xf9] sm:$0xff]
        %v347 = vld [vmem:[%s259 + $0x109] sm:$0xff]
        %v348 = vld [vmem:[%s259 + $0x111] sm:$0xff]
        %v349 = vld [vmem:[%s259 + $0x121] sm:$0xff]
        %v350 = vld [vmem:[%s259 + $0x129] sm:$0xff]
        %v351 = vld [vmem:[%s259 + $0x139] sm:$0xff]
        %v352 = vld [vmem:[%s259 + $0x141] sm:$0xff]
        %v353 = vld [vmem:[%s259 + $0x151] sm:$0xff]
        %v354 = vld [vmem:[%s259 + $0x159] sm:$0xff]
        %v355 = vld [vmem:[%s259 + $0x169] sm:$0xff]
        %v356 = vld [vmem:[%s259 + $0x171] sm:$0xff]
        %389 = vrot.lane.b32.xlu0 %v325, 4
        %v390 = vpop.permute.xlu0 %389
        %391 = vrot.lane.b32.xlu0 %v326, 4
        %v392 = vpop.permute.xlu0 %391
        %393 = vrot.lane.b32.xlu0 %v327, 4
        %v394 = vpop.permute.xlu0 %393
        %395 = vrot.lane.b32.xlu0 %v328, 4
        %v396 = vpop.permute.xlu0 %395
        %397 = vrot.lane.b32.xlu0 %v329, 4
        %v398 = vpop.permute.xlu0 %397
        %399 = vrot.lane.b32.xlu0 %v330, 4
        %v400 = vpop.permute.xlu0 %399
        %401 = vrot.lane.b32.xlu0 %v331, 4
        %v402 = vpop.permute.xlu0 %401
        %403 = vrot.lane.b32.xlu0 %v332, 4
        %v404 = vpop.permute.xlu0 %403
        %405 = vrot.lane.b32.xlu0 %v333, 4
        %v406 = vpop.permute.xlu0 %405
        %407 = vrot.lane.b32.xlu0 %v334, 4
        %v408 = vpop.permute.xlu0 %407
        %409 = vrot.lane.b32.xlu0 %v335, 4
        %v410 = vpop.permute.xlu0 %409
        %411 = vrot.lane.b32.xlu0 %v336, 4
        %v412 = vpop.permute.xlu0 %411
        %413 = vrot.lane.b32.xlu0 %v337, 4
        %v414 = vpop.permute.xlu0 %413
        %415 = vrot.lane.b32.xlu0 %v338, 4
        %v416 = vpop.permute.xlu0 %415
        %417 = vrot.lane.b32.xlu0 %v339, 4
        %v418 = vpop.permute.xlu0 %417
        %419 = vrot.lane.b32.xlu0 %v340, 4
        %v420 = vpop.permute.xlu0 %419
        %421 = vrot.lane.b32.xlu0 %v341, 4
        %v422 = vpop.permute.xlu0 %421
        %423 = vrot.lane.b32.xlu0 %v342, 4
        %v424 = vpop.permute.xlu0 %423
        %425 = vrot.lane.b32.xlu0 %v343, 4
        %v426 = vpop.permute.xlu0 %425
        %427 = vrot.lane.b32.xlu0 %v344, 4
        %v428 = vpop.permute.xlu0 %427
        %429 = vrot.lane.b32.xlu0 %v345, 4
        %v430 = vpop.permute.xlu0 %429
        %431 = vrot.lane.b32.xlu0 %v346, 4
        %v432 = vpop.permute.xlu0 %431
        %433 = vrot.lane.b32.xlu0 %v347, 4
        %v434 = vpop.permute.xlu0 %433
        %435 = vrot.lane.b32.xlu0 %v348, 4
        %v436 = vpop.permute.xlu0 %435
        %437 = vrot.lane.b32.xlu0 %v349, 4
        %v438 = vpop.permute.xlu0 %437
        %439 = vrot.lane.b32.xlu0 %v350, 4
        %v440 = vpop.permute.xlu0 %439
        %441 = vrot.lane.b32.xlu0 %v351, 4
        %v442 = vpop.permute.xlu0 %441
        %443 = vrot.lane.b32.xlu0 %v352, 4
        %v444 = vpop.permute.xlu0 %443
        %445 = vrot.lane.b32.xlu0 %v353, 4
        %v446 = vpop.permute.xlu0 %445
        %447 = vrot.lane.b32.xlu0 %v354, 4
        %v448 = vpop.permute.xlu0 %447
        %449 = vrot.lane.b32.xlu0 %v355, 4
        %v450 = vpop.permute.xlu0 %449
        %451 = vrot.lane.b32.xlu0 %v356, 4
        %v452 = vpop.permute.xlu0 %451
        %vm485 = vcmask 64544
        %486 = vst.msk [vmem:[#allocation2] sm:$0xff] %vm485, %v390
        %487 = vst.msk [vmem:[#allocation2 + $0x8] sm:$0xff] %vm485, %v392
        %488 = vst.msk [vmem:[#allocation2 + $0x10] sm:$0xff] %vm485, %v394
        %489 = vst.msk [vmem:[#allocation2 + $0x18] sm:$0xff] %vm485, %v396
        %490 = vst.msk [vmem:[#allocation2 + $0x20] sm:$0xff] %vm485, %v398
        %491 = vst.msk [vmem:[#allocation2 + $0x28] sm:$0xff] %vm485, %v400
        %492 = vst.msk [vmem:[#allocation2 + $0x30] sm:$0xff] %vm485, %v402
        %493 = vst.msk [vmem:[#allocation2 + $0x38] sm:$0xff] %vm485, %v404
        %494 = vst.msk [vmem:[#allocation2 + $0x40] sm:$0xff] %vm485, %v406
        %495 = vst.msk [vmem:[#allocation2 + $0x48] sm:$0xff] %vm485, %v408
        %496 = vst.msk [vmem:[#allocation2 + $0x50] sm:$0xff] %vm485, %v410
        %497 = vst.msk [vmem:[#allocation2 + $0x58] sm:$0xff] %vm485, %v412
        %498 = vst.msk [vmem:[#allocation2 + $0x60] sm:$0xff] %vm485, %v414
        %499 = vst.msk [vmem:[#allocation2 + $0x68] sm:$0xff] %vm485, %v416
        %500 = vst.msk [vmem:[#allocation2 + $0x70] sm:$0xff] %vm485, %v418
        %501 = vst.msk [vmem:[#allocation2 + $0x78] sm:$0xff] %vm485, %v420
        %502 = vst.msk [vmem:[#allocation2 + $0x80] sm:$0xff] %vm485, %v422
        %503 = vst.msk [vmem:[#allocation2 + $0x88] sm:$0xff] %vm485, %v424
        %504 = vst.msk [vmem:[#allocation2 + $0x90] sm:$0xff] %vm485, %v426
        %505 = vst.msk [vmem:[#allocation2 + $0x98] sm:$0xff] %vm485, %v428
        %506 = vst.msk [vmem:[#allocation2 + $0xa0] sm:$0xff] %vm485, %v430
        %507 = vst.msk [vmem:[#allocation2 + $0xa8] sm:$0xff] %vm485, %v432
        %508 = vst.msk [vmem:[#allocation2 + $0xb0] sm:$0xff] %vm485, %v434
        %509 = vst.msk [vmem:[#allocation2 + $0xb8] sm:$0xff] %vm485, %v436
        %510 = vst.msk [vmem:[#allocation2 + $0xc0] sm:$0xff] %vm485, %v438
        %511 = vst.msk [vmem:[#allocation2 + $0xc8] sm:$0xff] %vm485, %v440
        %512 = vst.msk [vmem:[#allocation2 + $0xd0] sm:$0xff] %vm485, %v442
        %513 = vst.msk [vmem:[#allocation2 + $0xd8] sm:$0xff] %vm485, %v444
        %514 = vst.msk [vmem:[#allocation2 + $0xe0] sm:$0xff] %vm485, %v446
        %515 = vst.msk [vmem:[#allocation2 + $0xe8] sm:$0xff] %vm485, %v448
        %516 = vst.msk [vmem:[#allocation2 + $0xf0] sm:$0xff] %vm485, %v450
        %517 = vst.msk [vmem:[#allocation2 + $0xf8] sm:$0xff] %vm485, %v452
        %v518 = vld [vmem:[%s259 + $0x2] sm:$0xff]
        %v519 = vld [vmem:[%s259 + $0xa] sm:$0xff]
        %v520 = vld [vmem:[%s259 + $0x1a] sm:$0xff]
        %v521 = vld [vmem:[%s259 + $0x22] sm:$0xff]
        %v522 = vld [vmem:[%s259 + $0x32] sm:$0xff]
        %v523 = vld [vmem:[%s259 + $0x3a] sm:$0xff]
        %v524 = vld [vmem:[%s259 + $0x4a] sm:$0xff]
        %v525 = vld [vmem:[%s259 + $0x52] sm:$0xff]
        %v526 = vld [vmem:[%s259 + $0x62] sm:$0xff]
        %v527 = vld [vmem:[%s259 + $0x6a] sm:$0xff]
        %v528 = vld [vmem:[%s259 + $0x7a] sm:$0xff]
        %v529 = vld [vmem:[%s259 + $0x82] sm:$0xff]
        %v530 = vld [vmem:[%s259 + $0x92] sm:$0xff]
        %v531 = vld [vmem:[%s259 + $0x9a] sm:$0xff]
        %v532 = vld [vmem:[%s259 + $0xaa] sm:$0xff]
        %v533 = vld [vmem:[%s259 + $0xb2] sm:$0xff]
        %v534 = vld [vmem:[%s259 + $0xc2] sm:$0xff]
        %v535 = vld [vmem:[%s259 + $0xca] sm:$0xff]
        %v536 = vld [vmem:[%s259 + $0xda] sm:$0xff]
        %v537 = vld [vmem:[%s259 + $0xe2] sm:$0xff]
        %v538 = vld [vmem:[%s259 + $0xf2] sm:$0xff]
        %v539 = vld [vmem:[%s259 + $0xfa] sm:$0xff]
        %v540 = vld [vmem:[%s259 + $0x10a] sm:$0xff]
        %v541 = vld [vmem:[%s259 + $0x112] sm:$0xff]
        %v542 = vld [vmem:[%s259 + $0x122] sm:$0xff]
        %v543 = vld [vmem:[%s259 + $0x12a] sm:$0xff]
        %v544 = vld [vmem:[%s259 + $0x13a] sm:$0xff]
        %v545 = vld [vmem:[%s259 + $0x142] sm:$0xff]
        %v546 = vld [vmem:[%s259 + $0x152] sm:$0xff]
        %v547 = vld [vmem:[%s259 + $0x15a] sm:$0xff]
        %v548 = vld [vmem:[%s259 + $0x16a] sm:$0xff]
        %v549 = vld [vmem:[%s259 + $0x172] sm:$0xff]
        %582 = vrot.lane.b32.xlu0 %v518, 8
        %v583 = vpop.permute.xlu0 %582
        %584 = vrot.lane.b32.xlu0 %v519, 8
        %v585 = vpop.permute.xlu0 %584
        %586 = vrot.lane.b32.xlu0 %v520, 8
        %v587 = vpop.permute.xlu0 %586
        %588 = vrot.lane.b32.xlu0 %v521, 8
        %v589 = vpop.permute.xlu0 %588
        %590 = vrot.lane.b32.xlu0 %v522, 8
        %v591 = vpop.permute.xlu0 %590
        %592 = vrot.lane.b32.xlu0 %v523, 8
        %v593 = vpop.permute.xlu0 %592
        %594 = vrot.lane.b32.xlu0 %v524, 8
        %v595 = vpop.permute.xlu0 %594
        %596 = vrot.lane.b32.xlu0 %v525, 8
        %v597 = vpop.permute.xlu0 %596
        %598 = vrot.lane.b32.xlu0 %v526, 8
        %v599 = vpop.permute.xlu0 %598
        %600 = vrot.lane.b32.xlu0 %v527, 8
        %v601 = vpop.permute.xlu0 %600
        %602 = vrot.lane.b32.xlu0 %v528, 8
        %v603 = vpop.permute.xlu0 %602
        %604 = vrot.lane.b32.xlu0 %v529, 8
        %v605 = vpop.permute.xlu0 %604
        %606 = vrot.lane.b32.xlu0 %v530, 8
        %v607 = vpop.permute.xlu0 %606
        %608 = vrot.lane.b32.xlu0 %v531, 8
        %v609 = vpop.permute.xlu0 %608
        %610 = vrot.lane.b32.xlu0 %v532, 8
        %v611 = vpop.permute.xlu0 %610
        %612 = vrot.lane.b32.xlu0 %v533, 8
        %v613 = vpop.permute.xlu0 %612
        %614 = vrot.lane.b32.xlu0 %v534, 8
        %v615 = vpop.permute.xlu0 %614
        %616 = vrot.lane.b32.xlu0 %v535, 8
        %v617 = vpop.permute.xlu0 %616
        %618 = vrot.lane.b32.xlu0 %v536, 8
        %v619 = vpop.permute.xlu0 %618
        %620 = vrot.lane.b32.xlu0 %v537, 8
        %v621 = vpop.permute.xlu0 %620
        %622 = vrot.lane.b32.xlu0 %v538, 8
        %v623 = vpop.permute.xlu0 %622
        %624 = vrot.lane.b32.xlu0 %v539, 8
        %v625 = vpop.permute.xlu0 %624
        %626 = vrot.lane.b32.xlu0 %v540, 8
        %v627 = vpop.permute.xlu0 %626
        %628 = vrot.lane.b32.xlu0 %v541, 8
        %v629 = vpop.permute.xlu0 %628
        %630 = vrot.lane.b32.xlu0 %v542, 8
        %v631 = vpop.permute.xlu0 %630
        %632 = vrot.lane.b32.xlu0 %v543, 8
        %v633 = vpop.permute.xlu0 %632
        %634 = vrot.lane.b32.xlu0 %v544, 8
        %v635 = vpop.permute.xlu0 %634
        %636 = vrot.lane.b32.xlu0 %v545, 8
        %v637 = vpop.permute.xlu0 %636
        %638 = vrot.lane.b32.xlu0 %v546, 8
        %v639 = vpop.permute.xlu0 %638
        %640 = vrot.lane.b32.xlu0 %v547, 8
        %v641 = vpop.permute.xlu0 %640
        %642 = vrot.lane.b32.xlu0 %v548, 8
        %v643 = vpop.permute.xlu0 %642
        %644 = vrot.lane.b32.xlu0 %v549, 8
        %v645 = vpop.permute.xlu0 %644
        %vm678 = vcmask 97344
        %679 = vst.msk [vmem:[#allocation2] sm:$0xff] %vm678, %v583
        %680 = vst.msk [vmem:[#allocation2 + $0x8] sm:$0xff] %vm678, %v585
        %681 = vst.msk [vmem:[#allocation2 + $0x10] sm:$0xff] %vm678, %v587
        %682 = vst.msk [vmem:[#allocation2 + $0x18] sm:$0xff] %vm678, %v589
        %683 = vst.msk [vmem:[#allocation2 + $0x20] sm:$0xff] %vm678, %v591
        %684 = vst.msk [vmem:[#allocation2 + $0x28] sm:$0xff] %vm678, %v593
        %685 = vst.msk [vmem:[#allocation2 + $0x30] sm:$0xff] %vm678, %v595
        %686 = vst.msk [vmem:[#allocation2 + $0x38] sm:$0xff] %vm678, %v597
        %687 = vst.msk [vmem:[#allocation2 + $0x40] sm:$0xff] %vm678, %v599
        %688 = vst.msk [vmem:[#allocation2 + $0x48] sm:$0xff] %vm678, %v601
        %689 = vst.msk [vmem:[#allocation2 + $0x50] sm:$0xff] %vm678, %v603
        %690 = vst.msk [vmem:[#allocation2 + $0x58] sm:$0xff] %vm678, %v605
        %691 = vst.msk [vmem:[#allocation2 + $0x60] sm:$0xff] %vm678, %v607
        %692 = vst.msk [vmem:[#allocation2 + $0x68] sm:$0xff] %vm678, %v609
        %693 = vst.msk [vmem:[#allocation2 + $0x70] sm:$0xff] %vm678, %v611
        %694 = vst.msk [vmem:[#allocation2 + $0x78] sm:$0xff] %vm678, %v613
        %695 = vst.msk [vmem:[#allocation2 + $0x80] sm:$0xff] %vm678, %v615
        %696 = vst.msk [vmem:[#allocation2 + $0x88] sm:$0xff] %vm678, %v617
        %697 = vst.msk [vmem:[#allocation2 + $0x90] sm:$0xff] %vm678, %v619
        %698 = vst.msk [vmem:[#allocation2 + $0x98] sm:$0xff] %vm678, %v621
        %699 = vst.msk [vmem:[#allocation2 + $0xa0] sm:$0xff] %vm678, %v623
        %700 = vst.msk [vmem:[#allocation2 + $0xa8] sm:$0xff] %vm678, %v625
        %701 = vst.msk [vmem:[#allocation2 + $0xb0] sm:$0xff] %vm678, %v627
        %702 = vst.msk [vmem:[#allocation2 + $0xb8] sm:$0xff] %vm678, %v629
        %703 = vst.msk [vmem:[#allocation2 + $0xc0] sm:$0xff] %vm678, %v631
        %704 = vst.msk [vmem:[#allocation2 + $0xc8] sm:$0xff] %vm678, %v633
        %705 = vst.msk [vmem:[#allocation2 + $0xd0] sm:$0xff] %vm678, %v635
        %706 = vst.msk [vmem:[#allocation2 + $0xd8] sm:$0xff] %vm678, %v637
        %707 = vst.msk [vmem:[#allocation2 + $0xe0] sm:$0xff] %vm678, %v639
        %708 = vst.msk [vmem:[#allocation2 + $0xe8] sm:$0xff] %vm678, %v641
        %709 = vst.msk [vmem:[#allocation2 + $0xf0] sm:$0xff] %vm678, %v643
        %710 = vst.msk [vmem:[#allocation2 + $0xf8] sm:$0xff] %vm678, %v645
        %s711 = sadd.s32 %s224, 1
        %s712 = smul.u32 %s711, 24
        %s713 = scalar_lea.vmem %s215, %s712
        %v714 = vld [vmem:[%s713] sm:$0xff]
        %v715 = vld [vmem:[%s713 + $0x8] sm:$0xff]
        %v716 = vld [vmem:[%s713 + $0x18] sm:$0xff]
        %v717 = vld [vmem:[%s713 + $0x20] sm:$0xff]
        %v718 = vld [vmem:[%s713 + $0x30] sm:$0xff]
        %v719 = vld [vmem:[%s713 + $0x38] sm:$0xff]
        %v720 = vld [vmem:[%s713 + $0x48] sm:$0xff]
        %v721 = vld [vmem:[%s713 + $0x50] sm:$0xff]
        %v722 = vld [vmem:[%s713 + $0x60] sm:$0xff]
        %v723 = vld [vmem:[%s713 + $0x68] sm:$0xff]
        %v724 = vld [vmem:[%s713 + $0x78] sm:$0xff]
        %v725 = vld [vmem:[%s713 + $0x80] sm:$0xff]
        %v726 = vld [vmem:[%s713 + $0x90] sm:$0xff]
        %v727 = vld [vmem:[%s713 + $0x98] sm:$0xff]
        %v728 = vld [vmem:[%s713 + $0xa8] sm:$0xff]
        %v729 = vld [vmem:[%s713 + $0xb0] sm:$0xff]
        %v730 = vld [vmem:[%s713 + $0xc0] sm:$0xff]
        %v731 = vld [vmem:[%s713 + $0xc8] sm:$0xff]
        %v732 = vld [vmem:[%s713 + $0xd8] sm:$0xff]
        %v733 = vld [vmem:[%s713 + $0xe0] sm:$0xff]
        %v734 = vld [vmem:[%s713 + $0xf0] sm:$0xff]
        %v735 = vld [vmem:[%s713 + $0xf8] sm:$0xff]
        %v736 = vld [vmem:[%s713 + $0x108] sm:$0xff]
        %v737 = vld [vmem:[%s713 + $0x110] sm:$0xff]
        %v738 = vld [vmem:[%s713 + $0x120] sm:$0xff]
        %v739 = vld [vmem:[%s713 + $0x128] sm:$0xff]
        %v740 = vld [vmem:[%s713 + $0x138] sm:$0xff]
        %v741 = vld [vmem:[%s713 + $0x140] sm:$0xff]
        %v742 = vld [vmem:[%s713 + $0x150] sm:$0xff]
        %v743 = vld [vmem:[%s713 + $0x158] sm:$0xff]
        %v744 = vld [vmem:[%s713 + $0x168] sm:$0xff]
        %v745 = vld [vmem:[%s713 + $0x170] sm:$0xff]
        %778 = vrot.lane.b32.xlu0 %v714, 12
        %v779 = vpop.permute.xlu0 %778
        %780 = vrot.lane.b32.xlu0 %v715, 12
        %v781 = vpop.permute.xlu0 %780
        %782 = vrot.lane.b32.xlu0 %v716, 12
        %v783 = vpop.permute.xlu0 %782
        %784 = vrot.lane.b32.xlu0 %v717, 12
        %v785 = vpop.permute.xlu0 %784
        %786 = vrot.lane.b32.xlu0 %v718, 12
        %v787 = vpop.permute.xlu0 %786
        %788 = vrot.lane.b32.xlu0 %v719, 12
        %v789 = vpop.permute.xlu0 %788
        %790 = vrot.lane.b32.xlu0 %v720, 12
        %v791 = vpop.permute.xlu0 %790
        %792 = vrot.lane.b32.xlu0 %v721, 12
        %v793 = vpop.permute.xlu0 %792
        %794 = vrot.lane.b32.xlu0 %v722, 12
        %v795 = vpop.permute.xlu0 %794
        %796 = vrot.lane.b32.xlu0 %v723, 12
        %v797 = vpop.permute.xlu0 %796
        %798 = vrot.lane.b32.xlu0 %v724, 12
        %v799 = vpop.permute.xlu0 %798
        %800 = vrot.lane.b32.xlu0 %v725, 12
        %v801 = vpop.permute.xlu0 %800
        %802 = vrot.lane.b32.xlu0 %v726, 12
        %v803 = vpop.permute.xlu0 %802
        %804 = vrot.lane.b32.xlu0 %v727, 12
        %v805 = vpop.permute.xlu0 %804
        %806 = vrot.lane.b32.xlu0 %v728, 12
        %v807 = vpop.permute.xlu0 %806
        %808 = vrot.lane.b32.xlu0 %v729, 12
        %v809 = vpop.permute.xlu0 %808
        %810 = vrot.lane.b32.xlu0 %v730, 12
        %v811 = vpop.permute.xlu0 %810
        %812 = vrot.lane.b32.xlu0 %v731, 12
        %v813 = vpop.permute.xlu0 %812
        %814 = vrot.lane.b32.xlu0 %v732, 12
        %v815 = vpop.permute.xlu0 %814
        %816 = vrot.lane.b32.xlu0 %v733, 12
        %v817 = vpop.permute.xlu0 %816
        %818 = vrot.lane.b32.xlu0 %v734, 12
        %v819 = vpop.permute.xlu0 %818
        %820 = vrot.lane.b32.xlu0 %v735, 12
        %v821 = vpop.permute.xlu0 %820
        %822 = vrot.lane.b32.xlu0 %v736, 12
        %v823 = vpop.permute.xlu0 %822
        %824 = vrot.lane.b32.xlu0 %v737, 12
        %v825 = vpop.permute.xlu0 %824
        %826 = vrot.lane.b32.xlu0 %v738, 12
        %v827 = vpop.permute.xlu0 %826
        %828 = vrot.lane.b32.xlu0 %v739, 12
        %v829 = vpop.permute.xlu0 %828
        %830 = vrot.lane.b32.xlu0 %v740, 12
        %v831 = vpop.permute.xlu0 %830
        %832 = vrot.lane.b32.xlu0 %v741, 12
        %v833 = vpop.permute.xlu0 %832
        %834 = vrot.lane.b32.xlu0 %v742, 12
        %v835 = vpop.permute.xlu0 %834
        %836 = vrot.lane.b32.xlu0 %v743, 12
        %v837 = vpop.permute.xlu0 %836
        %838 = vrot.lane.b32.xlu0 %v744, 12
        %v839 = vpop.permute.xlu0 %838
        %840 = vrot.lane.b32.xlu0 %v745, 12
        %v841 = vpop.permute.xlu0 %840
        %vm874 = vcmask 130144
        %875 = vst.msk [vmem:[#allocation2] sm:$0xff] %vm874, %v779
        %876 = vst.msk [vmem:[#allocation2 + $0x8] sm:$0xff] %vm874, %v781
        %877 = vst.msk [vmem:[#allocation2 + $0x10] sm:$0xff] %vm874, %v783
        %878 = vst.msk [vmem:[#allocation2 + $0x18] sm:$0xff] %vm874, %v785
        %879 = vst.msk [vmem:[#allocation2 + $0x20] sm:$0xff] %vm874, %v787
        %880 = vst.msk [vmem:[#allocation2 + $0x28] sm:$0xff] %vm874, %v789
        %881 = vst.msk [vmem:[#allocation2 + $0x30] sm:$0xff] %vm874, %v791
        %882 = vst.msk [vmem:[#allocation2 + $0x38] sm:$0xff] %vm874, %v793
        %883 = vst.msk [vmem:[#allocation2 + $0x40] sm:$0xff] %vm874, %v795
        %884 = vst.msk [vmem:[#allocation2 + $0x48] sm:$0xff] %vm874, %v797
        %885 = vst.msk [vmem:[#allocation2 + $0x50] sm:$0xff] %vm874, %v799
        %886 = vst.msk [vmem:[#allocation2 + $0x58] sm:$0xff] %vm874, %v801
        %887 = vst.msk [vmem:[#allocation2 + $0x60] sm:$0xff] %vm874, %v803
        %888 = vst.msk [vmem:[#allocation2 + $0x68] sm:$0xff] %vm874, %v805
        %889 = vst.msk [vmem:[#allocation2 + $0x70] sm:$0xff] %vm874, %v807
        %890 = vst.msk [vmem:[#allocation2 + $0x78] sm:$0xff] %vm874, %v809
        %891 = vst.msk [vmem:[#allocation2 + $0x80] sm:$0xff] %vm874, %v811
        %892 = vst.msk [vmem:[#allocation2 + $0x88] sm:$0xff] %vm874, %v813
        %893 = vst.msk [vmem:[#allocation2 + $0x90] sm:$0xff] %vm874, %v815
        %894 = vst.msk [vmem:[#allocation2 + $0x98] sm:$0xff] %vm874, %v817
        %895 = vst.msk [vmem:[#allocation2 + $0xa0] sm:$0xff] %vm874, %v819
        %896 = vst.msk [vmem:[#allocation2 + $0xa8] sm:$0xff] %vm874, %v821
        %897 = vst.msk [vmem:[#allocation2 + $0xb0] sm:$0xff] %vm874, %v823
        %898 = vst.msk [vmem:[#allocation2 + $0xb8] sm:$0xff] %vm874, %v825
        %899 = vst.msk [vmem:[#allocation2 + $0xc0] sm:$0xff] %vm874, %v827
        %900 = vst.msk [vmem:[#allocation2 + $0xc8] sm:$0xff] %vm874, %v829
        %901 = vst.msk [vmem:[#allocation2 + $0xd0] sm:$0xff] %vm874, %v831
        %902 = vst.msk [vmem:[#allocation2 + $0xd8] sm:$0xff] %vm874, %v833
        %903 = vst.msk [vmem:[#allocation2 + $0xe0] sm:$0xff] %vm874, %v835
        %904 = vst.msk [vmem:[#allocation2 + $0xe8] sm:$0xff] %vm874, %v837
        %905 = vst.msk [vmem:[#allocation2 + $0xf0] sm:$0xff] %vm874, %v839
        %906 = vst.msk [vmem:[#allocation2 + $0xf8] sm:$0xff] %vm874, %v841
        %v907 = vld [vmem:[%s713 + $0x1] sm:$0xff]
        %v908 = vld [vmem:[%s713 + $0x9] sm:$0xff]
        %v909 = vld [vmem:[%s713 + $0x19] sm:$0xff]
        %v910 = vld [vmem:[%s713 + $0x21] sm:$0xff]
        %v911 = vld [vmem:[%s713 + $0x31] sm:$0xff]
        %v912 = vld [vmem:[%s713 + $0x39] sm:$0xff]
        %v913 = vld [vmem:[%s713 + $0x49] sm:$0xff]
        %v914 = vld [vmem:[%s713 + $0x51] sm:$0xff]
        %v915 = vld [vmem:[%s713 + $0x61] sm:$0xff]
        %v916 = vld [vmem:[%s713 + $0x69] sm:$0xff]
        %v917 = vld [vmem:[%s713 + $0x79] sm:$0xff]
        %v918 = vld [vmem:[%s713 + $0x81] sm:$0xff]
        %v919 = vld [vmem:[%s713 + $0x91] sm:$0xff]
        %v920 = vld [vmem:[%s713 + $0x99] sm:$0xff]
        %v921 = vld [vmem:[%s713 + $0xa9] sm:$0xff]
        %v922 = vld [vmem:[%s713 + $0xb1] sm:$0xff]
        %v923 = vld [vmem:[%s713 + $0xc1] sm:$0xff]
        %v924 = vld [vmem:[%s713 + $0xc9] sm:$0xff]
        %v925 = vld [vmem:[%s713 + $0xd9] sm:$0xff]
        %v926 = vld [vmem:[%s713 + $0xe1] sm:$0xff]
        %v927 = vld [vmem:[%s713 + $0xf1] sm:$0xff]
        %v928 = vld [vmem:[%s713 + $0xf9] sm:$0xff]
        %v929 = vld [vmem:[%s713 + $0x109] sm:$0xff]
        %v930 = vld [vmem:[%s713 + $0x111] sm:$0xff]
        %v931 = vld [vmem:[%s713 + $0x121] sm:$0xff]
        %v932 = vld [vmem:[%s713 + $0x129] sm:$0xff]
        %v933 = vld [vmem:[%s713 + $0x139] sm:$0xff]
        %v934 = vld [vmem:[%s713 + $0x141] sm:$0xff]
        %v935 = vld [vmem:[%s713 + $0x151] sm:$0xff]
        %v936 = vld [vmem:[%s713 + $0x159] sm:$0xff]
        %v937 = vld [vmem:[%s713 + $0x169] sm:$0xff]
        %v938 = vld [vmem:[%s713 + $0x171] sm:$0xff]
        %971 = vrot.lane.b32.xlu0 %v907, 16
        %v972 = vpop.permute.xlu0 %971
        %973 = vrot.lane.b32.xlu0 %v908, 16
        %v974 = vpop.permute.xlu0 %973
        %975 = vrot.lane.b32.xlu0 %v909, 16
        %v976 = vpop.permute.xlu0 %975
        %977 = vrot.lane.b32.xlu0 %v910, 16
        %v978 = vpop.permute.xlu0 %977
        %979 = vrot.lane.b32.xlu0 %v911, 16
        %v980 = vpop.permute.xlu0 %979
        %981 = vrot.lane.b32.xlu0 %v912, 16
        %v982 = vpop.permute.xlu0 %981
        %983 = vrot.lane.b32.xlu0 %v913, 16
        %v984 = vpop.permute.xlu0 %983
        %985 = vrot.lane.b32.xlu0 %v914, 16
        %v986 = vpop.permute.xlu0 %985
        %987 = vrot.lane.b32.xlu0 %v915, 16
        %v988 = vpop.permute.xlu0 %987
        %989 = vrot.lane.b32.xlu0 %v916, 16
        %v990 = vpop.permute.xlu0 %989
        %991 = vrot.lane.b32.xlu0 %v917, 16
        %v992 = vpop.permute.xlu0 %991
        %993 = vrot.lane.b32.xlu0 %v918, 16
        %v994 = vpop.permute.xlu0 %993
        %995 = vrot.lane.b32.xlu0 %v919, 16
        %v996 = vpop.permute.xlu0 %995
        %997 = vrot.lane.b32.xlu0 %v920, 16
        %v998 = vpop.permute.xlu0 %997
        %999 = vrot.lane.b32.xlu0 %v921, 16
        %v1000 = vpop.permute.xlu0 %999
        %1001 = vrot.lane.b32.xlu0 %v922, 16
        %v1002 = vpop.permute.xlu0 %1001
        %1003 = vrot.lane.b32.xlu0 %v923, 16
        %v1004 = vpop.permute.xlu0 %1003
        %1005 = vrot.lane.b32.xlu0 %v924, 16
        %v1006 = vpop.permute.xlu0 %1005
        %1007 = vrot.lane.b32.xlu0 %v925, 16
        %v1008 = vpop.permute.xlu0 %1007
        %1009 = vrot.lane.b32.xlu0 %v926, 16
        %v1010 = vpop.permute.xlu0 %1009
        %1011 = vrot.lane.b32.xlu0 %v927, 16
        %v1012 = vpop.permute.xlu0 %1011
        %1013 = vrot.lane.b32.xlu0 %v928, 16
        %v1014 = vpop.permute.xlu0 %1013
        %1015 = vrot.lane.b32.xlu0 %v929, 16
        %v1016 = vpop.permute.xlu0 %1015
        %1017 = vrot.lane.b32.xlu0 %v930, 16
        %v1018 = vpop.permute.xlu0 %1017
        %1019 = vrot.lane.b32.xlu0 %v931, 16
        %v1020 = vpop.permute.xlu0 %1019
        %1021 = vrot.lane.b32.xlu0 %v932, 16
        %v1022 = vpop.permute.xlu0 %1021
        %1023 = vrot.lane.b32.xlu0 %v933, 16
        %v1024 = vpop.permute.xlu0 %1023
        %1025 = vrot.lane.b32.xlu0 %v934, 16
        %v1026 = vpop.permute.xlu0 %1025
        %1027 = vrot.lane.b32.xlu0 %v935, 16
        %v1028 = vpop.permute.xlu0 %1027
        %1029 = vrot.lane.b32.xlu0 %v936, 16
        %v1030 = vpop.permute.xlu0 %1029
        %1031 = vrot.lane.b32.xlu0 %v937, 16
        %v1032 = vpop.permute.xlu0 %1031
        %1033 = vrot.lane.b32.xlu0 %v938, 16
        %v1034 = vpop.permute.xlu0 %1033
        %vm1067 = vcmask 162944
        %1068 = vst.msk [vmem:[#allocation2] sm:$0xff] %vm1067, %v972
        %1069 = vst.msk [vmem:[#allocation2 + $0x8] sm:$0xff] %vm1067, %v974
        %1070 = vst.msk [vmem:[#allocation2 + $0x10] sm:$0xff] %vm1067, %v976
        %1071 = vst.msk [vmem:[#allocation2 + $0x18] sm:$0xff] %vm1067, %v978
        %1072 = vst.msk [vmem:[#allocation2 + $0x20] sm:$0xff] %vm1067, %v980
        %1073 = vst.msk [vmem:[#allocation2 + $0x28] sm:$0xff] %vm1067, %v982
        %1074 = vst.msk [vmem:[#allocation2 + $0x30] sm:$0xff] %vm1067, %v984
        %1075 = vst.msk [vmem:[#allocation2 + $0x38] sm:$0xff] %vm1067, %v986
        %1076 = vst.msk [vmem:[#allocation2 + $0x40] sm:$0xff] %vm1067, %v988
        %1077 = vst.msk [vmem:[#allocation2 + $0x48] sm:$0xff] %vm1067, %v990
        %1078 = vst.msk [vmem:[#allocation2 + $0x50] sm:$0xff] %vm1067, %v992
        %1079 = vst.msk [vmem:[#allocation2 + $0x58] sm:$0xff] %vm1067, %v994
        %1080 = vst.msk [vmem:[#allocation2 + $0x60] sm:$0xff] %vm1067, %v996
        %1081 = vst.msk [vmem:[#allocation2 + $0x68] sm:$0xff] %vm1067, %v998
        %1082 = vst.msk [vmem:[#allocation2 + $0x70] sm:$0xff] %vm1067, %v1000
        %1083 = vst.msk [vmem:[#allocation2 + $0x78] sm:$0xff] %vm1067, %v1002
        %1084 = vst.msk [vmem:[#allocation2 + $0x80] sm:$0xff] %vm1067, %v1004
        %1085 = vst.msk [vmem:[#allocation2 + $0x88] sm:$0xff] %vm1067, %v1006
        %1086 = vst.msk [vmem:[#allocation2 + $0x90] sm:$0xff] %vm1067, %v1008
        %1087 = vst.msk [vmem:[#allocation2 + $0x98] sm:$0xff] %vm1067, %v1010
        %1088 = vst.msk [vmem:[#allocation2 + $0xa0] sm:$0xff] %vm1067, %v1012
        %1089 = vst.msk [vmem:[#allocation2 + $0xa8] sm:$0xff] %vm1067, %v1014
        %1090 = vst.msk [vmem:[#allocation2 + $0xb0] sm:$0xff] %vm1067, %v1016
        %1091 = vst.msk [vmem:[#allocation2 + $0xb8] sm:$0xff] %vm1067, %v1018
        %1092 = vst.msk [vmem:[#allocation2 + $0xc0] sm:$0xff] %vm1067, %v1020
        %1093 = vst.msk [vmem:[#allocation2 + $0xc8] sm:$0xff] %vm1067, %v1022
        %1094 = vst.msk [vmem:[#allocation2 + $0xd0] sm:$0xff] %vm1067, %v1024
        %1095 = vst.msk [vmem:[#allocation2 + $0xd8] sm:$0xff] %vm1067, %v1026
        %1096 = vst.msk [vmem:[#allocation2 + $0xe0] sm:$0xff] %vm1067, %v1028
        %1097 = vst.msk [vmem:[#allocation2 + $0xe8] sm:$0xff] %vm1067, %v1030
        %1098 = vst.msk [vmem:[#allocation2 + $0xf0] sm:$0xff] %vm1067, %v1032
        %1099 = vst.msk [vmem:[#allocation2 + $0xf8] sm:$0xff] %vm1067, %v1034
        %v1100 = vld [vmem:[%s713 + $0x2] sm:$0xff]
        %v1101 = vld [vmem:[%s713 + $0xa] sm:$0xff]
        %v1102 = vld [vmem:[%s713 + $0x1a] sm:$0xff]
        %v1103 = vld [vmem:[%s713 + $0x22] sm:$0xff]
        %v1104 = vld [vmem:[%s713 + $0x32] sm:$0xff]
        %v1105 = vld [vmem:[%s713 + $0x3a] sm:$0xff]
        %v1106 = vld [vmem:[%s713 + $0x4a] sm:$0xff]
        %v1107 = vld [vmem:[%s713 + $0x52] sm:$0xff]
        %v1108 = vld [vmem:[%s713 + $0x62] sm:$0xff]
        %v1109 = vld [vmem:[%s713 + $0x6a] sm:$0xff]
        %v1110 = vld [vmem:[%s713 + $0x7a] sm:$0xff]
        %v1111 = vld [vmem:[%s713 + $0x82] sm:$0xff]
        %v1112 = vld [vmem:[%s713 + $0x92] sm:$0xff]
        %v1113 = vld [vmem:[%s713 + $0x9a] sm:$0xff]
        %v1114 = vld [vmem:[%s713 + $0xaa] sm:$0xff]
        %v1115 = vld [vmem:[%s713 + $0xb2] sm:$0xff]
        %v1116 = vld [vmem:[%s713 + $0xc2] sm:$0xff]
        %v1117 = vld [vmem:[%s713 + $0xca] sm:$0xff]
        %v1118 = vld [vmem:[%s713 + $0xda] sm:$0xff]
        %v1119 = vld [vmem:[%s713 + $0xe2] sm:$0xff]
        %v1120 = vld [vmem:[%s713 + $0xf2] sm:$0xff]
        %v1121 = vld [vmem:[%s713 + $0xfa] sm:$0xff]
        %v1122 = vld [vmem:[%s713 + $0x10a] sm:$0xff]
        %v1123 = vld [vmem:[%s713 + $0x112] sm:$0xff]
        %v1124 = vld [vmem:[%s713 + $0x122] sm:$0xff]
        %v1125 = vld [vmem:[%s713 + $0x12a] sm:$0xff]
        %v1126 = vld [vmem:[%s713 + $0x13a] sm:$0xff]
        %v1127 = vld [vmem:[%s713 + $0x142] sm:$0xff]
        %v1128 = vld [vmem:[%s713 + $0x152] sm:$0xff]
        %v1129 = vld [vmem:[%s713 + $0x15a] sm:$0xff]
        %v1130 = vld [vmem:[%s713 + $0x16a] sm:$0xff]
        %v1131 = vld [vmem:[%s713 + $0x172] sm:$0xff]
        %1164 = vrot.lane.b32.xlu0 %v1100, 20
        %v1165 = vpop.permute.xlu0 %1164
        %1166 = vrot.lane.b32.xlu0 %v1101, 20
        %v1167 = vpop.permute.xlu0 %1166
        %1168 = vrot.lane.b32.xlu0 %v1102, 20
        %v1169 = vpop.permute.xlu0 %1168
        %1170 = vrot.lane.b32.xlu0 %v1103, 20
        %v1171 = vpop.permute.xlu0 %1170
        %1172 = vrot.lane.b32.xlu0 %v1104, 20
        %v1173 = vpop.permute.xlu0 %1172
        %1174 = vrot.lane.b32.xlu0 %v1105, 20
        %v1175 = vpop.permute.xlu0 %1174
        %1176 = vrot.lane.b32.xlu0 %v1106, 20
        %v1177 = vpop.permute.xlu0 %1176
        %1178 = vrot.lane.b32.xlu0 %v1107, 20
        %v1179 = vpop.permute.xlu0 %1178
        %1180 = vrot.lane.b32.xlu0 %v1108, 20
        %v1181 = vpop.permute.xlu0 %1180
        %1182 = vrot.lane.b32.xlu0 %v1109, 20
        %v1183 = vpop.permute.xlu0 %1182
        %1184 = vrot.lane.b32.xlu0 %v1110, 20
        %v1185 = vpop.permute.xlu0 %1184
        %1186 = vrot.lane.b32.xlu0 %v1111, 20
        %v1187 = vpop.permute.xlu0 %1186
        %1188 = vrot.lane.b32.xlu0 %v1112, 20
        %v1189 = vpop.permute.xlu0 %1188
        %1190 = vrot.lane.b32.xlu0 %v1113, 20
        %v1191 = vpop.permute.xlu0 %1190
        %1192 = vrot.lane.b32.xlu0 %v1114, 20
        %v1193 = vpop.permute.xlu0 %1192
        %1194 = vrot.lane.b32.xlu0 %v1115, 20
        %v1195 = vpop.permute.xlu0 %1194
        %1196 = vrot.lane.b32.xlu0 %v1116, 20
        %v1197 = vpop.permute.xlu0 %1196
        %1198 = vrot.lane.b32.xlu0 %v1117, 20
        %v1199 = vpop.permute.xlu0 %1198
        %1200 = vrot.lane.b32.xlu0 %v1118, 20
        %v1201 = vpop.permute.xlu0 %1200
        %1202 = vrot.lane.b32.xlu0 %v1119, 20
        %v1203 = vpop.permute.xlu0 %1202
        %1204 = vrot.lane.b32.xlu0 %v1120, 20
        %v1205 = vpop.permute.xlu0 %1204
        %1206 = vrot.lane.b32.xlu0 %v1121, 20
        %v1207 = vpop.permute.xlu0 %1206
        %1208 = vrot.lane.b32.xlu0 %v1122, 20
        %v1209 = vpop.permute.xlu0 %1208
        %1210 = vrot.lane.b32.xlu0 %v1123, 20
        %v1211 = vpop.permute.xlu0 %1210
        %1212 = vrot.lane.b32.xlu0 %v1124, 20
        %v1213 = vpop.permute.xlu0 %1212
        %1214 = vrot.lane.b32.xlu0 %v1125, 20
        %v1215 = vpop.permute.xlu0 %1214
        %1216 = vrot.lane.b32.xlu0 %v1126, 20
        %v1217 = vpop.permute.xlu0 %1216
        %1218 = vrot.lane.b32.xlu0 %v1127, 20
        %v1219 = vpop.permute.xlu0 %1218
        %1220 = vrot.lane.b32.xlu0 %v1128, 20
        %v1221 = vpop.permute.xlu0 %1220
        %1222 = vrot.lane.b32.xlu0 %v1129, 20
        %v1223 = vpop.permute.xlu0 %1222
        %1224 = vrot.lane.b32.xlu0 %v1130, 20
        %v1225 = vpop.permute.xlu0 %1224
        %1226 = vrot.lane.b32.xlu0 %v1131, 20
        %v1227 = vpop.permute.xlu0 %1226
        %vm1260 = vcmask 195744
        %1261 = vst.msk [vmem:[#allocation2] sm:$0xff] %vm1260, %v1165
        %1262 = vst.msk [vmem:[#allocation2 + $0x8] sm:$0xff] %vm1260, %v1167
        %1263 = vst.msk [vmem:[#allocation2 + $0x10] sm:$0xff] %vm1260, %v1169
        %1264 = vst.msk [vmem:[#allocation2 + $0x18] sm:$0xff] %vm1260, %v1171
        %1265 = vst.msk [vmem:[#allocation2 + $0x20] sm:$0xff] %vm1260, %v1173
        %1266 = vst.msk [vmem:[#allocation2 + $0x28] sm:$0xff] %vm1260, %v1175
        %1267 = vst.msk [vmem:[#allocation2 + $0x30] sm:$0xff] %vm1260, %v1177
        %1268 = vst.msk [vmem:[#allocation2 + $0x38] sm:$0xff] %vm1260, %v1179
        %1269 = vst.msk [vmem:[#allocation2 + $0x40] sm:$0xff] %vm1260, %v1181
        %1270 = vst.msk [vmem:[#allocation2 + $0x48] sm:$0xff] %vm1260, %v1183
        %1271 = vst.msk [vmem:[#allocation2 + $0x50] sm:$0xff] %vm1260, %v1185
        %1272 = vst.msk [vmem:[#allocation2 + $0x58] sm:$0xff] %vm1260, %v1187
        %1273 = vst.msk [vmem:[#allocation2 + $0x60] sm:$0xff] %vm1260, %v1189
        %1274 = vst.msk [vmem:[#allocation2 + $0x68] sm:$0xff] %vm1260, %v1191
        %1275 = vst.msk [vmem:[#allocation2 + $0x70] sm:$0xff] %vm1260, %v1193
        %1276 = vst.msk [vmem:[#allocation2 + $0x78] sm:$0xff] %vm1260, %v1195
        %1277 = vst.msk [vmem:[#allocation2 + $0x80] sm:$0xff] %vm1260, %v1197
        %1278 = vst.msk [vmem:[#allocation2 + $0x88] sm:$0xff] %vm1260, %v1199
        %1279 = vst.msk [vmem:[#allocation2 + $0x90] sm:$0xff] %vm1260, %v1201
        %1280 = vst.msk [vmem:[#allocation2 + $0x98] sm:$0xff] %vm1260, %v1203
        %1281 = vst.msk [vmem:[#allocation2 + $0xa0] sm:$0xff] %vm1260, %v1205
        %1282 = vst.msk [vmem:[#allocation2 + $0xa8] sm:$0xff] %vm1260, %v1207
        %1283 = vst.msk [vmem:[#allocation2 + $0xb0] sm:$0xff] %vm1260, %v1209
        %1284 = vst.msk [vmem:[#allocation2 + $0xb8] sm:$0xff] %vm1260, %v1211
        %1285 = vst.msk [vmem:[#allocation2 + $0xc0] sm:$0xff] %vm1260, %v1213
        %1286 = vst.msk [vmem:[#allocation2 + $0xc8] sm:$0xff] %vm1260, %v1215
        %1287 = vst.msk [vmem:[#allocation2 + $0xd0] sm:$0xff] %vm1260, %v1217
        %1288 = vst.msk [vmem:[#allocation2 + $0xd8] sm:$0xff] %vm1260, %v1219
        %1289 = vst.msk [vmem:[#allocation2 + $0xe0] sm:$0xff] %vm1260, %v1221
        %1290 = vst.msk [vmem:[#allocation2 + $0xe8] sm:$0xff] %vm1260, %v1223
        %1291 = vst.msk [vmem:[#allocation2 + $0xf0] sm:$0xff] %vm1260, %v1225
        %1292 = vst.msk [vmem:[#allocation2 + $0xf8] sm:$0xff] %vm1260, %v1227
        %s1293 = sadd.s32 %s224, 2
        %s1294 = smul.u32 %s1293, 24
        %s1295 = scalar_lea.vmem %s215, %s1294
        %v1296 = vld [vmem:[%s1295] sm:$0xff]
        %v1297 = vld [vmem:[%s1295 + $0x8] sm:$0xff]
        %v1298 = vld [vmem:[%s1295 + $0x18] sm:$0xff]
        %v1299 = vld [vmem:[%s1295 + $0x20] sm:$0xff]
        %v1300 = vld [vmem:[%s1295 + $0x30] sm:$0xff]
        %v1301 = vld [vmem:[%s1295 + $0x38] sm:$0xff]
        %v1302 = vld [vmem:[%s1295 + $0x48] sm:$0xff]
        %v1303 = vld [vmem:[%s1295 + $0x50] sm:$0xff]
        %v1304 = vld [vmem:[%s1295 + $0x60] sm:$0xff]
        %v1305 = vld [vmem:[%s1295 + $0x68] sm:$0xff]
        %v1306 = vld [vmem:[%s1295 + $0x78] sm:$0xff]
        %v1307 = vld [vmem:[%s1295 + $0x80] sm:$0xff]
        %v1308 = vld [vmem:[%s1295 + $0x90] sm:$0xff]
        %v1309 = vld [vmem:[%s1295 + $0x98] sm:$0xff]
        %v1310 = vld [vmem:[%s1295 + $0xa8] sm:$0xff]
        %v1311 = vld [vmem:[%s1295 + $0xb0] sm:$0xff]
        %v1312 = vld [vmem:[%s1295 + $0xc0] sm:$0xff]
        %v1313 = vld [vmem:[%s1295 + $0xc8] sm:$0xff]
        %v1314 = vld [vmem:[%s1295 + $0xd8] sm:$0xff]
        %v1315 = vld [vmem:[%s1295 + $0xe0] sm:$0xff]
        %v1316 = vld [vmem:[%s1295 + $0xf0] sm:$0xff]
        %v1317 = vld [vmem:[%s1295 + $0xf8] sm:$0xff]
        %v1318 = vld [vmem:[%s1295 + $0x108] sm:$0xff]
        %v1319 = vld [vmem:[%s1295 + $0x110] sm:$0xff]
        %v1320 = vld [vmem:[%s1295 + $0x120] sm:$0xff]
        %v1321 = vld [vmem:[%s1295 + $0x128] sm:$0xff]
        %v1322 = vld [vmem:[%s1295 + $0x138] sm:$0xff]
        %v1323 = vld [vmem:[%s1295 + $0x140] sm:$0xff]
        %v1324 = vld [vmem:[%s1295 + $0x150] sm:$0xff]
        %v1325 = vld [vmem:[%s1295 + $0x158] sm:$0xff]
        %v1326 = vld [vmem:[%s1295 + $0x168] sm:$0xff]
        %v1327 = vld [vmem:[%s1295 + $0x170] sm:$0xff]
        %1360 = vrot.lane.b32.xlu0 %v1296, 24
        %v1361 = vpop.permute.xlu0 %1360
        %1362 = vrot.lane.b32.xlu0 %v1297, 24
        %v1363 = vpop.permute.xlu0 %1362
        %1364 = vrot.lane.b32.xlu0 %v1298, 24
        %v1365 = vpop.permute.xlu0 %1364
        %1366 = vrot.lane.b32.xlu0 %v1299, 24
        %v1367 = vpop.permute.xlu0 %1366
        %1368 = vrot.lane.b32.xlu0 %v1300, 24
        %v1369 = vpop.permute.xlu0 %1368
        %1370 = vrot.lane.b32.xlu0 %v1301, 24
        %v1371 = vpop.permute.xlu0 %1370
        %1372 = vrot.lane.b32.xlu0 %v1302, 24
        %v1373 = vpop.permute.xlu0 %1372
        %1374 = vrot.lane.b32.xlu0 %v1303, 24
        %v1375 = vpop.permute.xlu0 %1374
        %1376 = vrot.lane.b32.xlu0 %v1304, 24
        %v1377 = vpop.permute.xlu0 %1376
        %1378 = vrot.lane.b32.xlu0 %v1305, 24
        %v1379 = vpop.permute.xlu0 %1378
        %1380 = vrot.lane.b32.xlu0 %v1306, 24
        %v1381 = vpop.permute.xlu0 %1380
        %1382 = vrot.lane.b32.xlu0 %v1307, 24
        %v1383 = vpop.permute.xlu0 %1382
        %1384 = vrot.lane.b32.xlu0 %v1308, 24
        %v1385 = vpop.permute.xlu0 %1384
        %1386 = vrot.lane.b32.xlu0 %v1309, 24
        %v1387 = vpop.permute.xlu0 %1386
        %1388 = vrot.lane.b32.xlu0 %v1310, 24
        %v1389 = vpop.permute.xlu0 %1388
        %1390 = vrot.lane.b32.xlu0 %v1311, 24
        %v1391 = vpop.permute.xlu0 %1390
        %1392 = vrot.lane.b32.xlu0 %v1312, 24
        %v1393 = vpop.permute.xlu0 %1392
        %1394 = vrot.lane.b32.xlu0 %v1313, 24
        %v1395 = vpop.permute.xlu0 %1394
        %1396 = vrot.lane.b32.xlu0 %v1314, 24
        %v1397 = vpop.permute.xlu0 %1396
        %1398 = vrot.lane.b32.xlu0 %v1315, 24
        %v1399 = vpop.permute.xlu0 %1398
        %1400 = vrot.lane.b32.xlu0 %v1316, 24
        %v1401 = vpop.permute.xlu0 %1400
        %1402 = vrot.lane.b32.xlu0 %v1317, 24
        %v1403 = vpop.permute.xlu0 %1402
        %1404 = vrot.lane.b32.xlu0 %v1318, 24
        %v1405 = vpop.permute.xlu0 %1404
        %1406 = vrot.lane.b32.xlu0 %v1319, 24
        %v1407 = vpop.permute.xlu0 %1406
        %1408 = vrot.lane.b32.xlu0 %v1320, 24
        %v1409 = vpop.permute.xlu0 %1408
        %1410 = vrot.lane.b32.xlu0 %v1321, 24
        %v1411 = vpop.permute.xlu0 %1410
        %1412 = vrot.lane.b32.xlu0 %v1322, 24
        %v1413 = vpop.permute.xlu0 %1412
        %1414 = vrot.lane.b32.xlu0 %v1323, 24
        %v1415 = vpop.permute.xlu0 %1414
        %1416 = vrot.lane.b32.xlu0 %v1324, 24
        %v1417 = vpop.permute.xlu0 %1416
        %1418 = vrot.lane.b32.xlu0 %v1325, 24
        %v1419 = vpop.permute.xlu0 %1418
        %1420 = vrot.lane.b32.xlu0 %v1326, 24
        %v1421 = vpop.permute.xlu0 %1420
        %1422 = vrot.lane.b32.xlu0 %v1327, 24
        %v1423 = vpop.permute.xlu0 %1422
        %vm1456 = vcmask 228544
        %1457 = vst.msk [vmem:[#allocation2] sm:$0xff] %vm1456, %v1361
        %1458 = vst.msk [vmem:[#allocation2 + $0x8] sm:$0xff] %vm1456, %v1363
        %1459 = vst.msk [vmem:[#allocation2 + $0x10] sm:$0xff] %vm1456, %v1365
        %1460 = vst.msk [vmem:[#allocation2 + $0x18] sm:$0xff] %vm1456, %v1367
        %1461 = vst.msk [vmem:[#allocation2 + $0x20] sm:$0xff] %vm1456, %v1369
        %1462 = vst.msk [vmem:[#allocation2 + $0x28] sm:$0xff] %vm1456, %v1371
        %1463 = vst.msk [vmem:[#allocation2 + $0x30] sm:$0xff] %vm1456, %v1373
        %1464 = vst.msk [vmem:[#allocation2 + $0x38] sm:$0xff] %vm1456, %v1375
        %1465 = vst.msk [vmem:[#allocation2 + $0x40] sm:$0xff] %vm1456, %v1377
        %1466 = vst.msk [vmem:[#allocation2 + $0x48] sm:$0xff] %vm1456, %v1379
        %1467 = vst.msk [vmem:[#allocation2 + $0x50] sm:$0xff] %vm1456, %v1381
        %1468 = vst.msk [vmem:[#allocation2 + $0x58] sm:$0xff] %vm1456, %v1383
        %1469 = vst.msk [vmem:[#allocation2 + $0x60] sm:$0xff] %vm1456, %v1385
        %1470 = vst.msk [vmem:[#allocation2 + $0x68] sm:$0xff] %vm1456, %v1387
        %1471 = vst.msk [vmem:[#allocation2 + $0x70] sm:$0xff] %vm1456, %v1389
        %1472 = vst.msk [vmem:[#allocation2 + $0x78] sm:$0xff] %vm1456, %v1391
        %1473 = vst.msk [vmem:[#allocation2 + $0x80] sm:$0xff] %vm1456, %v1393
        %1474 = vst.msk [vmem:[#allocation2 + $0x88] sm:$0xff] %vm1456, %v1395
        %1475 = vst.msk [vmem:[#allocation2 + $0x90] sm:$0xff] %vm1456, %v1397
        %1476 = vst.msk [vmem:[#allocation2 + $0x98] sm:$0xff] %vm1456, %v1399
        %1477 = vst.msk [vmem:[#allocation2 + $0xa0] sm:$0xff] %vm1456, %v1401
        %1478 = vst.msk [vmem:[#allocation2 + $0xa8] sm:$0xff] %vm1456, %v1403
        %1479 = vst.msk [vmem:[#allocation2 + $0xb0] sm:$0xff] %vm1456, %v1405
        %1480 = vst.msk [vmem:[#allocation2 + $0xb8] sm:$0xff] %vm1456, %v1407
        %1481 = vst.msk [vmem:[#allocation2 + $0xc0] sm:$0xff] %vm1456, %v1409
        %1482 = vst.msk [vmem:[#allocation2 + $0xc8] sm:$0xff] %vm1456, %v1411
        %1483 = vst.msk [vmem:[#allocation2 + $0xd0] sm:$0xff] %vm1456, %v1413
        %1484 = vst.msk [vmem:[#allocation2 + $0xd8] sm:$0xff] %vm1456, %v1415
        %1485 = vst.msk [vmem:[#allocation2 + $0xe0] sm:$0xff] %vm1456, %v1417
        %1486 = vst.msk [vmem:[#allocation2 + $0xe8] sm:$0xff] %vm1456, %v1419
        %1487 = vst.msk [vmem:[#allocation2 + $0xf0] sm:$0xff] %vm1456, %v1421
        %1488 = vst.msk [vmem:[#allocation2 + $0xf8] sm:$0xff] %vm1456, %v1423
        %v1489 = vld [vmem:[%s1295 + $0x1] sm:$0xff]
        %v1490 = vld [vmem:[%s1295 + $0x9] sm:$0xff]
        %v1491 = vld [vmem:[%s1295 + $0x19] sm:$0xff]
        %v1492 = vld [vmem:[%s1295 + $0x21] sm:$0xff]
        %v1493 = vld [vmem:[%s1295 + $0x31] sm:$0xff]
        %v1494 = vld [vmem:[%s1295 + $0x39] sm:$0xff]
        %v1495 = vld [vmem:[%s1295 + $0x49] sm:$0xff]
        %v1496 = vld [vmem:[%s1295 + $0x51] sm:$0xff]
        %v1497 = vld [vmem:[%s1295 + $0x61] sm:$0xff]
        %v1498 = vld [vmem:[%s1295 + $0x69] sm:$0xff]
        %v1499 = vld [vmem:[%s1295 + $0x79] sm:$0xff]
        %v1500 = vld [vmem:[%s1295 + $0x81] sm:$0xff]
        %v1501 = vld [vmem:[%s1295 + $0x91] sm:$0xff]
        %v1502 = vld [vmem:[%s1295 + $0x99] sm:$0xff]
        %v1503 = vld [vmem:[%s1295 + $0xa9] sm:$0xff]
        %v1504 = vld [vmem:[%s1295 + $0xb1] sm:$0xff]
        %v1505 = vld [vmem:[%s1295 + $0xc1] sm:$0xff]
        %v1506 = vld [vmem:[%s1295 + $0xc9] sm:$0xff]
        %v1507 = vld [vmem:[%s1295 + $0xd9] sm:$0xff]
        %v1508 = vld [vmem:[%s1295 + $0xe1] sm:$0xff]
        %v1509 = vld [vmem:[%s1295 + $0xf1] sm:$0xff]
        %v1510 = vld [vmem:[%s1295 + $0xf9] sm:$0xff]
        %v1511 = vld [vmem:[%s1295 + $0x109] sm:$0xff]
        %v1512 = vld [vmem:[%s1295 + $0x111] sm:$0xff]
        %v1513 = vld [vmem:[%s1295 + $0x121] sm:$0xff]
        %v1514 = vld [vmem:[%s1295 + $0x129] sm:$0xff]
        %v1515 = vld [vmem:[%s1295 + $0x139] sm:$0xff]
        %v1516 = vld [vmem:[%s1295 + $0x141] sm:$0xff]
        %v1517 = vld [vmem:[%s1295 + $0x151] sm:$0xff]
        %v1518 = vld [vmem:[%s1295 + $0x159] sm:$0xff]
        %v1519 = vld [vmem:[%s1295 + $0x169] sm:$0xff]
        %v1520 = vld [vmem:[%s1295 + $0x171] sm:$0xff]
        %1553 = vrot.lane.b32.xlu0 %v1489, 28
        %v1554 = vpop.permute.xlu0 %1553
        %1555 = vrot.lane.b32.xlu0 %v1490, 28
        %v1556 = vpop.permute.xlu0 %1555
        %1557 = vrot.lane.b32.xlu0 %v1491, 28
        %v1558 = vpop.permute.xlu0 %1557
        %1559 = vrot.lane.b32.xlu0 %v1492, 28
        %v1560 = vpop.permute.xlu0 %1559
        %1561 = vrot.lane.b32.xlu0 %v1493, 28
        %v1562 = vpop.permute.xlu0 %1561
        %1563 = vrot.lane.b32.xlu0 %v1494, 28
        %v1564 = vpop.permute.xlu0 %1563
        %1565 = vrot.lane.b32.xlu0 %v1495, 28
        %v1566 = vpop.permute.xlu0 %1565
        %1567 = vrot.lane.b32.xlu0 %v1496, 28
        %v1568 = vpop.permute.xlu0 %1567
        %1569 = vrot.lane.b32.xlu0 %v1497, 28
        %v1570 = vpop.permute.xlu0 %1569
        %1571 = vrot.lane.b32.xlu0 %v1498, 28
        %v1572 = vpop.permute.xlu0 %1571
        %1573 = vrot.lane.b32.xlu0 %v1499, 28
        %v1574 = vpop.permute.xlu0 %1573
        %1575 = vrot.lane.b32.xlu0 %v1500, 28
        %v1576 = vpop.permute.xlu0 %1575
        %1577 = vrot.lane.b32.xlu0 %v1501, 28
        %v1578 = vpop.permute.xlu0 %1577
        %1579 = vrot.lane.b32.xlu0 %v1502, 28
        %v1580 = vpop.permute.xlu0 %1579
        %1581 = vrot.lane.b32.xlu0 %v1503, 28
        %v1582 = vpop.permute.xlu0 %1581
        %1583 = vrot.lane.b32.xlu0 %v1504, 28
        %v1584 = vpop.permute.xlu0 %1583
        %1585 = vrot.lane.b32.xlu0 %v1505, 28
        %v1586 = vpop.permute.xlu0 %1585
        %1587 = vrot.lane.b32.xlu0 %v1506, 28
        %v1588 = vpop.permute.xlu0 %1587
        %1589 = vrot.lane.b32.xlu0 %v1507, 28
        %v1590 = vpop.permute.xlu0 %1589
        %1591 = vrot.lane.b32.xlu0 %v1508, 28
        %v1592 = vpop.permute.xlu0 %1591
        %1593 = vrot.lane.b32.xlu0 %v1509, 28
        %v1594 = vpop.permute.xlu0 %1593
        %1595 = vrot.lane.b32.xlu0 %v1510, 28
        %v1596 = vpop.permute.xlu0 %1595
        %1597 = vrot.lane.b32.xlu0 %v1511, 28
        %v1598 = vpop.permute.xlu0 %1597
        %1599 = vrot.lane.b32.xlu0 %v1512, 28
        %v1600 = vpop.permute.xlu0 %1599
        %1601 = vrot.lane.b32.xlu0 %v1513, 28
        %v1602 = vpop.permute.xlu0 %1601
        %1603 = vrot.lane.b32.xlu0 %v1514, 28
        %v1604 = vpop.permute.xlu0 %1603
        %1605 = vrot.lane.b32.xlu0 %v1515, 28
        %v1606 = vpop.permute.xlu0 %1605
        %1607 = vrot.lane.b32.xlu0 %v1516, 28
        %v1608 = vpop.permute.xlu0 %1607
        %1609 = vrot.lane.b32.xlu0 %v1517, 28
        %v1610 = vpop.permute.xlu0 %1609
        %1611 = vrot.lane.b32.xlu0 %v1518, 28
        %v1612 = vpop.permute.xlu0 %1611
        %1613 = vrot.lane.b32.xlu0 %v1519, 28
        %v1614 = vpop.permute.xlu0 %1613
        %1615 = vrot.lane.b32.xlu0 %v1520, 28
        %v1616 = vpop.permute.xlu0 %1615
        %vm1649 = vcmask 261344
        %1650 = vst.msk [vmem:[#allocation2] sm:$0xff] %vm1649, %v1554
        %1651 = vst.msk [vmem:[#allocation2 + $0x8] sm:$0xff] %vm1649, %v1556
        %1652 = vst.msk [vmem:[#allocation2 + $0x10] sm:$0xff] %vm1649, %v1558
        %1653 = vst.msk [vmem:[#allocation2 + $0x18] sm:$0xff] %vm1649, %v1560
        %1654 = vst.msk [vmem:[#allocation2 + $0x20] sm:$0xff] %vm1649, %v1562
        %1655 = vst.msk [vmem:[#allocation2 + $0x28] sm:$0xff] %vm1649, %v1564
        %1656 = vst.msk [vmem:[#allocation2 + $0x30] sm:$0xff] %vm1649, %v1566
        %1657 = vst.msk [vmem:[#allocation2 + $0x38] sm:$0xff] %vm1649, %v1568
        %1658 = vst.msk [vmem:[#allocation2 + $0x40] sm:$0xff] %vm1649, %v1570
        %1659 = vst.msk [vmem:[#allocation2 + $0x48] sm:$0xff] %vm1649, %v1572
        %1660 = vst.msk [vmem:[#allocation2 + $0x50] sm:$0xff] %vm1649, %v1574
        %1661 = vst.msk [vmem:[#allocation2 + $0x58] sm:$0xff] %vm1649, %v1576
        %1662 = vst.msk [vmem:[#allocation2 + $0x60] sm:$0xff] %vm1649, %v1578
        %1663 = vst.msk [vmem:[#allocation2 + $0x68] sm:$0xff] %vm1649, %v1580
        %1664 = vst.msk [vmem:[#allocation2 + $0x70] sm:$0xff] %vm1649, %v1582
        %1665 = vst.msk [vmem:[#allocation2 + $0x78] sm:$0xff] %vm1649, %v1584
        %1666 = vst.msk [vmem:[#allocation2 + $0x80] sm:$0xff] %vm1649, %v1586
        %1667 = vst.msk [vmem:[#allocation2 + $0x88] sm:$0xff] %vm1649, %v1588
        %1668 = vst.msk [vmem:[#allocation2 + $0x90] sm:$0xff] %vm1649, %v1590
        %1669 = vst.msk [vmem:[#allocation2 + $0x98] sm:$0xff] %vm1649, %v1592
        %1670 = vst.msk [vmem:[#allocation2 + $0xa0] sm:$0xff] %vm1649, %v1594
        %1671 = vst.msk [vmem:[#allocation2 + $0xa8] sm:$0xff] %vm1649, %v1596
        %1672 = vst.msk [vmem:[#allocation2 + $0xb0] sm:$0xff] %vm1649, %v1598
        %1673 = vst.msk [vmem:[#allocation2 + $0xb8] sm:$0xff] %vm1649, %v1600
        %1674 = vst.msk [vmem:[#allocation2 + $0xc0] sm:$0xff] %vm1649, %v1602
        %1675 = vst.msk [vmem:[#allocation2 + $0xc8] sm:$0xff] %vm1649, %v1604
        %1676 = vst.msk [vmem:[#allocation2 + $0xd0] sm:$0xff] %vm1649, %v1606
        %1677 = vst.msk [vmem:[#allocation2 + $0xd8] sm:$0xff] %vm1649, %v1608
        %1678 = vst.msk [vmem:[#allocation2 + $0xe0] sm:$0xff] %vm1649, %v1610
        %1679 = vst.msk [vmem:[#allocation2 + $0xe8] sm:$0xff] %vm1649, %v1612
        %1680 = vst.msk [vmem:[#allocation2 + $0xf0] sm:$0xff] %vm1649, %v1614
        %1681 = vst.msk [vmem:[#allocation2 + $0xf8] sm:$0xff] %vm1649, %v1616
        %v1682 = vld [vmem:[%s1295 + $0x2] sm:$0xff]
        %v1683 = vld [vmem:[%s1295 + $0xa] sm:$0xff]
        %v1684 = vld [vmem:[%s1295 + $0x1a] sm:$0xff]
        %v1685 = vld [vmem:[%s1295 + $0x22] sm:$0xff]
        %v1686 = vld [vmem:[%s1295 + $0x32] sm:$0xff]
        %v1687 = vld [vmem:[%s1295 + $0x3a] sm:$0xff]
        %v1688 = vld [vmem:[%s1295 + $0x4a] sm:$0xff]
        %v1689 = vld [vmem:[%s1295 + $0x52] sm:$0xff]
        %v1690 = vld [vmem:[%s1295 + $0x62] sm:$0xff]
        %v1691 = vld [vmem:[%s1295 + $0x6a] sm:$0xff]
        %v1692 = vld [vmem:[%s1295 + $0x7a] sm:$0xff]
        %v1693 = vld [vmem:[%s1295 + $0x82] sm:$0xff]
        %v1694 = vld [vmem:[%s1295 + $0x92] sm:$0xff]
        %v1695 = vld [vmem:[%s1295 + $0x9a] sm:$0xff]
        %v1696 = vld [vmem:[%s1295 + $0xaa] sm:$0xff]
        %v1697 = vld [vmem:[%s1295 + $0xb2] sm:$0xff]
        %v1698 = vld [vmem:[%s1295 + $0xc2] sm:$0xff]
        %v1699 = vld [vmem:[%s1295 + $0xca] sm:$0xff]
        %v1700 = vld [vmem:[%s1295 + $0xda] sm:$0xff]
        %v1701 = vld [vmem:[%s1295 + $0xe2] sm:$0xff]
        %v1702 = vld [vmem:[%s1295 + $0xf2] sm:$0xff]
        %v1703 = vld [vmem:[%s1295 + $0xfa] sm:$0xff]
        %v1704 = vld [vmem:[%s1295 + $0x10a] sm:$0xff]
        %v1705 = vld [vmem:[%s1295 + $0x112] sm:$0xff]
        %v1706 = vld [vmem:[%s1295 + $0x122] sm:$0xff]
        %v1707 = vld [vmem:[%s1295 + $0x12a] sm:$0xff]
        %v1708 = vld [vmem:[%s1295 + $0x13a] sm:$0xff]
        %v1709 = vld [vmem:[%s1295 + $0x142] sm:$0xff]
        %v1710 = vld [vmem:[%s1295 + $0x152] sm:$0xff]
        %v1711 = vld [vmem:[%s1295 + $0x15a] sm:$0xff]
        %v1712 = vld [vmem:[%s1295 + $0x16a] sm:$0xff]
        %v1713 = vld [vmem:[%s1295 + $0x172] sm:$0xff]
        %1746 = vrot.lane.b32.xlu0 %v1682, 32
        %v1747 = vpop.permute.xlu0 %1746
        %1748 = vrot.lane.b32.xlu0 %v1683, 32
        %v1749 = vpop.permute.xlu0 %1748
        %1750 = vrot.lane.b32.xlu0 %v1684, 32
        %v1751 = vpop.permute.xlu0 %1750
        %1752 = vrot.lane.b32.xlu0 %v1685, 32
        %v1753 = vpop.permute.xlu0 %1752
        %1754 = vrot.lane.b32.xlu0 %v1686, 32
        %v1755 = vpop.permute.xlu0 %1754
        %1756 = vrot.lane.b32.xlu0 %v1687, 32
        %v1757 = vpop.permute.xlu0 %1756
        %1758 = vrot.lane.b32.xlu0 %v1688, 32
        %v1759 = vpop.permute.xlu0 %1758
        %1760 = vrot.lane.b32.xlu0 %v1689, 32
        %v1761 = vpop.permute.xlu0 %1760
        %1762 = vrot.lane.b32.xlu0 %v1690, 32
        %v1763 = vpop.permute.xlu0 %1762
        %1764 = vrot.lane.b32.xlu0 %v1691, 32
        %v1765 = vpop.permute.xlu0 %1764
        %1766 = vrot.lane.b32.xlu0 %v1692, 32
        %v1767 = vpop.permute.xlu0 %1766
        %1768 = vrot.lane.b32.xlu0 %v1693, 32
        %v1769 = vpop.permute.xlu0 %1768
        %1770 = vrot.lane.b32.xlu0 %v1694, 32
        %v1771 = vpop.permute.xlu0 %1770
        %1772 = vrot.lane.b32.xlu0 %v1695, 32
        %v1773 = vpop.permute.xlu0 %1772
        %1774 = vrot.lane.b32.xlu0 %v1696, 32
        %v1775 = vpop.permute.xlu0 %1774
        %1776 = vrot.lane.b32.xlu0 %v1697, 32
        %v1777 = vpop.permute.xlu0 %1776
        %1778 = vrot.lane.b32.xlu0 %v1698, 32
        %v1779 = vpop.permute.xlu0 %1778
        %1780 = vrot.lane.b32.xlu0 %v1699, 32
        %v1781 = vpop.permute.xlu0 %1780
        %1782 = vrot.lane.b32.xlu0 %v1700, 32
        %v1783 = vpop.permute.xlu0 %1782
        %1784 = vrot.lane.b32.xlu0 %v1701, 32
        %v1785 = vpop.permute.xlu0 %1784
        %1786 = vrot.lane.b32.xlu0 %v1702, 32
        %v1787 = vpop.permute.xlu0 %1786
        %1788 = vrot.lane.b32.xlu0 %v1703, 32
        %v1789 = vpop.permute.xlu0 %1788
        %1790 = vrot.lane.b32.xlu0 %v1704, 32
        %v1791 = vpop.permute.xlu0 %1790
        %1792 = vrot.lane.b32.xlu0 %v1705, 32
        %v1793 = vpop.permute.xlu0 %1792
        %1794 = vrot.lane.b32.xlu0 %v1706, 32
        %v1795 = vpop.permute.xlu0 %1794
        %1796 = vrot.lane.b32.xlu0 %v1707, 32
        %v1797 = vpop.permute.xlu0 %1796
        %1798 = vrot.lane.b32.xlu0 %v1708, 32
        %v1799 = vpop.permute.xlu0 %1798
        %1800 = vrot.lane.b32.xlu0 %v1709, 32
        %v1801 = vpop.permute.xlu0 %1800
        %1802 = vrot.lane.b32.xlu0 %v1710, 32
        %v1803 = vpop.permute.xlu0 %1802
        %1804 = vrot.lane.b32.xlu0 %v1711, 32
        %v1805 = vpop.permute.xlu0 %1804
        %1806 = vrot.lane.b32.xlu0 %v1712, 32
        %v1807 = vpop.permute.xlu0 %1806
        %1808 = vrot.lane.b32.xlu0 %v1713, 32
        %v1809 = vpop.permute.xlu0 %1808
        %vm1842 = vcmask 294144
        %1843 = vst.msk [vmem:[#allocation2] sm:$0xff] %vm1842, %v1747
        %1844 = vst.msk [vmem:[#allocation2 + $0x8] sm:$0xff] %vm1842, %v1749
        %1845 = vst.msk [vmem:[#allocation2 + $0x10] sm:$0xff] %vm1842, %v1751
        %1846 = vst.msk [vmem:[#allocation2 + $0x18] sm:$0xff] %vm1842, %v1753
        %1847 = vst.msk [vmem:[#allocation2 + $0x20] sm:$0xff] %vm1842, %v1755
        %1848 = vst.msk [vmem:[#allocation2 + $0x28] sm:$0xff] %vm1842, %v1757
        %1849 = vst.msk [vmem:[#allocation2 + $0x30] sm:$0xff] %vm1842, %v1759
        %1850 = vst.msk [vmem:[#allocation2 + $0x38] sm:$0xff] %vm1842, %v1761
        %1851 = vst.msk [vmem:[#allocation2 + $0x40] sm:$0xff] %vm1842, %v1763
        %1852 = vst.msk [vmem:[#allocation2 + $0x48] sm:$0xff] %vm1842, %v1765
        %1853 = vst.msk [vmem:[#allocation2 + $0x50] sm:$0xff] %vm1842, %v1767
        %1854 = vst.msk [vmem:[#allocation2 + $0x58] sm:$0xff] %vm1842, %v1769
        %1855 = vst.msk [vmem:[#allocation2 + $0x60] sm:$0xff] %vm1842, %v1771
        %1856 = vst.msk [vmem:[#allocation2 + $0x68] sm:$0xff] %vm1842, %v1773
        %1857 = vst.msk [vmem:[#allocation2 + $0x70] sm:$0xff] %vm1842, %v1775
        %1858 = vst.msk [vmem:[#allocation2 + $0x78] sm:$0xff] %vm1842, %v1777
        %1859 = vst.msk [vmem:[#allocation2 + $0x80] sm:$0xff] %vm1842, %v1779
        %1860 = vst.msk [vmem:[#allocation2 + $0x88] sm:$0xff] %vm1842, %v1781
        %1861 = vst.msk [vmem:[#allocation2 + $0x90] sm:$0xff] %vm1842, %v1783
        %1862 = vst.msk [vmem:[#allocation2 + $0x98] sm:$0xff] %vm1842, %v1785
        %1863 = vst.msk [vmem:[#allocation2 + $0xa0] sm:$0xff] %vm1842, %v1787
        %1864 = vst.msk [vmem:[#allocation2 + $0xa8] sm:$0xff] %vm1842, %v1789
        %1865 = vst.msk [vmem:[#allocation2 + $0xb0] sm:$0xff] %vm1842, %v1791
        %1866 = vst.msk [vmem:[#allocation2 + $0xb8] sm:$0xff] %vm1842, %v1793
        %1867 = vst.msk [vmem:[#allocation2 + $0xc0] sm:$0xff] %vm1842, %v1795
        %1868 = vst.msk [vmem:[#allocation2 + $0xc8] sm:$0xff] %vm1842, %v1797
        %1869 = vst.msk [vmem:[#allocation2 + $0xd0] sm:$0xff] %vm1842, %v1799
        %1870 = vst.msk [vmem:[#allocation2 + $0xd8] sm:$0xff] %vm1842, %v1801
        %1871 = vst.msk [vmem:[#allocation2 + $0xe0] sm:$0xff] %vm1842, %v1803
        %1872 = vst.msk [vmem:[#allocation2 + $0xe8] sm:$0xff] %vm1842, %v1805
        %1873 = vst.msk [vmem:[#allocation2 + $0xf0] sm:$0xff] %vm1842, %v1807
        %1874 = vst.msk [vmem:[#allocation2 + $0xf8] sm:$0xff] %vm1842, %v1809
        %v1875 = vld [vmem:[#allocation2] sm:$0xff]
        %v1876 = vld [vmem:[#allocation2 + $0x8] sm:$0xff]
        %v1877 = vld [vmem:[#allocation2 + $0x10] sm:$0xff]
        %v1878 = vld [vmem:[#allocation2 + $0x18] sm:$0xff]
        %v1879 = vld [vmem:[#allocation2 + $0x20] sm:$0xff]
        %v1880 = vld [vmem:[#allocation2 + $0x28] sm:$0xff]
        %v1881 = vld [vmem:[#allocation2 + $0x30] sm:$0xff]
        %v1882 = vld [vmem:[#allocation2 + $0x38] sm:$0xff]
        %v1883 = vld [vmem:[#allocation2 + $0x40] sm:$0xff]
        %v1884 = vld [vmem:[#allocation2 + $0x48] sm:$0xff]
        %v1885 = vld [vmem:[#allocation2 + $0x50] sm:$0xff]
        %v1886 = vld [vmem:[#allocation2 + $0x58] sm:$0xff]
        %v1887 = vld [vmem:[#allocation2 + $0x60] sm:$0xff]
        %v1888 = vld [vmem:[#allocation2 + $0x68] sm:$0xff]
        %v1889 = vld [vmem:[#allocation2 + $0x70] sm:$0xff]
        %v1890 = vld [vmem:[#allocation2 + $0x78] sm:$0xff]
        %v1891 = vld [vmem:[#allocation2 + $0x80] sm:$0xff]
        %v1892 = vld [vmem:[#allocation2 + $0x88] sm:$0xff]
        %v1893 = vld [vmem:[#allocation2 + $0x90] sm:$0xff]
        %v1894 = vld [vmem:[#allocation2 + $0x98] sm:$0xff]
        %v1895 = vld [vmem:[#allocation2 + $0xa0] sm:$0xff]
        %v1896 = vld [vmem:[#allocation2 + $0xa8] sm:$0xff]
        %v1897 = vld [vmem:[#allocation2 + $0xb0] sm:$0xff]
        %v1898 = vld [vmem:[#allocation2 + $0xb8] sm:$0xff]
        %v1899 = vld [vmem:[#allocation2 + $0xc0] sm:$0xff]
        %v1900 = vld [vmem:[#allocation2 + $0xc8] sm:$0xff]
        %v1901 = vld [vmem:[#allocation2 + $0xd0] sm:$0xff]
        %v1902 = vld [vmem:[#allocation2 + $0xd8] sm:$0xff]
        %v1903 = vld [vmem:[#allocation2 + $0xe0] sm:$0xff]
        %v1904 = vld [vmem:[#allocation2 + $0xe8] sm:$0xff]
        %v1905 = vld [vmem:[#allocation2 + $0xf0] sm:$0xff]
        %v1906 = vld [vmem:[#allocation2 + $0xf8] sm:$0xff]
        %v1907 = vld [vmem:[%s219] sm:$0xff]
        %v1908 = vld [vmem:[%s219 + $0x8] sm:$0xff]
        %v1909 = vld [vmem:[%s219 + $0x10] sm:$0xff]
        %v1910 = vld [vmem:[%s219 + $0x18] sm:$0xff]
        %v1911 = vld [vmem:[%s219 + $0x20] sm:$0xff]
        %v1912 = vld [vmem:[%s219 + $0x28] sm:$0xff]
        %v1913 = vld [vmem:[%s219 + $0x30] sm:$0xff]
        %v1914 = vld [vmem:[%s219 + $0x38] sm:$0xff]
        %v1915 = vld [vmem:[%s219 + $0x40] sm:$0xff]
        %v1916 = vld [vmem:[%s219 + $0x48] sm:$0xff]
        %v1917 = vld [vmem:[%s219 + $0x50] sm:$0xff]
        %v1918 = vld [vmem:[%s219 + $0x58] sm:$0xff]
        %v1919 = vld [vmem:[%s219 + $0x60] sm:$0xff]
        %v1920 = vld [vmem:[%s219 + $0x68] sm:$0xff]
        %v1921 = vld [vmem:[%s219 + $0x70] sm:$0xff]
        %v1922 = vld [vmem:[%s219 + $0x78] sm:$0xff]
        %v1923 = vld [vmem:[%s222] sm:$0x1]
        %v1925 = vperm.slane %v1923, 0
        %1927 = vmatpush.msra.mxu0 %v1922
        %1928 = vmatpush.msra.mxu0 %v1921
        %1929 = vmatpush.msra.mxu0 %v1920
        %1930 = vmatpush.msra.mxu0 %v1919
        %1931 = vmatpush.msra.mxu0 %v1918
        %1932 = vmatpush.msra.mxu0 %v1917
        %1933 = vmatpush.msra.mxu0 %v1916
        %1934 = vmatpush.msra.mxu0 %v1915
        %1935 = vmatpush.msra.mxu0 %v1914
        %1936 = vmatpush.msra.mxu0 %v1913
        %1937 = vmatpush.msra.mxu0 %v1912
        %1938 = vmatpush.msra.mxu0 %v1911
        %1939 = vmatpush.msra.mxu0 %v1910
        %1940 = vmatpush.msra.mxu0 %v1909
        %1941 = vmatpush.msra.mxu0 %v1908
        %1942 = vmatpush.msra.mxu0 %v1907
        %1943 = vmatmul.f32.gmra.mxu0 %v1875
        %v1944 = vpop.f32.mrf.mxu0
        %v1945 = vadd.f32 %v1925, %v1944
        %1946 = vmatmul.f32.gmra.mxu0 %v1876
        %v1947 = vpop.f32.mrf.mxu0
        %v1948 = vadd.f32 %v1925, %v1947
        %1949 = vmatmul.f32.gmra.mxu0 %v1877
        %v1950 = vpop.f32.mrf.mxu0
        %v1951 = vadd.f32 %v1925, %v1950
        %1952 = vmatmul.f32.gmra.mxu0 %v1878
        %v1953 = vpop.f32.mrf.mxu0
        %v1954 = vadd.f32 %v1925, %v1953
        %1955 = vmatmul.f32.gmra.mxu0 %v1879
        %v1956 = vpop.f32.mrf.mxu0
        %v1957 = vadd.f32 %v1925, %v1956
        %1958 = vmatmul.f32.gmra.mxu0 %v1880
        %v1959 = vpop.f32.mrf.mxu0
        %v1960 = vadd.f32 %v1925, %v1959
        %1961 = vmatmul.f32.gmra.mxu0 %v1881
        %v1962 = vpop.f32.mrf.mxu0
        %v1963 = vadd.f32 %v1925, %v1962
        %1964 = vmatmul.f32.gmra.mxu0 %v1882
        %v1965 = vpop.f32.mrf.mxu0
        %v1966 = vadd.f32 %v1925, %v1965
        %1967 = vmatmul.f32.gmra.mxu0 %v1883
        %v1968 = vpop.f32.mrf.mxu0
        %v1969 = vadd.f32 %v1925, %v1968
        %1970 = vmatmul.f32.gmra.mxu0 %v1884
        %v1971 = vpop.f32.mrf.mxu0
        %v1972 = vadd.f32 %v1925, %v1971
        %1973 = vmatmul.f32.gmra.mxu0 %v1885
        %v1974 = vpop.f32.mrf.mxu0
        %v1975 = vadd.f32 %v1925, %v1974
        %1976 = vmatmul.f32.gmra.mxu0 %v1886
        %v1977 = vpop.f32.mrf.mxu0
        %v1978 = vadd.f32 %v1925, %v1977
        %1979 = vmatmul.f32.gmra.mxu0 %v1887
        %v1980 = vpop.f32.mrf.mxu0
        %v1981 = vadd.f32 %v1925, %v1980
        %1982 = vmatmul.f32.gmra.mxu0 %v1888
        %v1983 = vpop.f32.mrf.mxu0
        %v1984 = vadd.f32 %v1925, %v1983
        %1985 = vmatmul.f32.gmra.mxu0 %v1889
        %v1986 = vpop.f32.mrf.mxu0
        %v1987 = vadd.f32 %v1925, %v1986
        %1988 = vmatmul.f32.gmra.mxu0 %v1890
        %v1989 = vpop.f32.mrf.mxu0
        %v1990 = vadd.f32 %v1925, %v1989
        %1991 = vmatmul.f32.gmra.mxu0 %v1891
        %v1992 = vpop.f32.mrf.mxu0
        %v1993 = vadd.f32 %v1925, %v1992
        %1994 = vmatmul.f32.gmra.mxu0 %v1892
        %v1995 = vpop.f32.mrf.mxu0
        %v1996 = vadd.f32 %v1925, %v1995
        %1997 = vmatmul.f32.gmra.mxu0 %v1893
        %v1998 = vpop.f32.mrf.mxu0
        %v1999 = vadd.f32 %v1925, %v1998
        %2000 = vmatmul.f32.gmra.mxu0 %v1894
        %v2001 = vpop.f32.mrf.mxu0
        %v2002 = vadd.f32 %v1925, %v2001
        %2003 = vmatmul.f32.gmra.mxu0 %v1895
        %v2004 = vpop.f32.mrf.mxu0
        %v2005 = vadd.f32 %v1925, %v2004
        %2006 = vmatmul.f32.gmra.mxu0 %v1896
        %v2007 = vpop.f32.mrf.mxu0
        %v2008 = vadd.f32 %v1925, %v2007
        %2009 = vmatmul.f32.gmra.mxu0 %v1897
        %v2010 = vpop.f32.mrf.mxu0
        %v2011 = vadd.f32 %v1925, %v2010
        %2012 = vmatmul.f32.gmra.mxu0 %v1898
        %v2013 = vpop.f32.mrf.mxu0
        %v2014 = vadd.f32 %v1925, %v2013
        %2015 = vmatmul.f32.gmra.mxu0 %v1899
        %v2016 = vpop.f32.mrf.mxu0
        %v2017 = vadd.f32 %v1925, %v2016
        %2018 = vmatmul.f32.gmra.mxu0 %v1900
        %v2019 = vpop.f32.mrf.mxu0
        %v2020 = vadd.f32 %v1925, %v2019
        %2021 = vmatmul.f32.gmra.mxu0 %v1901
        %v2022 = vpop.f32.mrf.mxu0
        %v2023 = vadd.f32 %v1925, %v2022
        %2024 = vmatmul.f32.gmra.mxu0 %v1902
        %v2025 = vpop.f32.mrf.mxu0
        %v2026 = vadd.f32 %v1925, %v2025
        %2027 = vmatmul.f32.gmra.mxu0 %v1903
        %v2028 = vpop.f32.mrf.mxu0
        %v2029 = vadd.f32 %v1925, %v2028
        %2030 = vmatmul.f32.gmra.mxu0 %v1904
        %v2031 = vpop.f32.mrf.mxu0
        %v2032 = vadd.f32 %v1925, %v2031
        %2033 = vmatmul.f32.gmra.mxu0 %v1905
        %v2034 = vpop.f32.mrf.mxu0
        %v2035 = vadd.f32 %v1925, %v2034
        %2036 = vmatmul.f32.gmra.mxu0 %v1906
        %v2037 = vpop.f32.mrf.mxu0
        %v2038 = vadd.f32 %v1925, %v2037
        %2039 = vdwg.mxu0
        %v2040 = vmax.f32 %v1945, 0.0
        %v2041 = vmax.f32 %v1948, 0.0
        %v2042 = vmax.f32 %v1951, 0.0
        %v2043 = vmax.f32 %v1954, 0.0
        %v2044 = vmax.f32 %v1957, 0.0
        %v2045 = vmax.f32 %v1960, 0.0
        %v2046 = vmax.f32 %v1963, 0.0
        %v2047 = vmax.f32 %v1966, 0.0
        %v2048 = vmax.f32 %v1969, 0.0
        %v2049 = vmax.f32 %v1972, 0.0
        %v2050 = vmax.f32 %v1975, 0.0
        %v2051 = vmax.f32 %v1978, 0.0
        %v2052 = vmax.f32 %v1981, 0.0
        %v2053 = vmax.f32 %v1984, 0.0
        %v2054 = vmax.f32 %v1987, 0.0
        %v2055 = vmax.f32 %v1990, 0.0
        %v2056 = vmax.f32 %v1993, 0.0
        %v2057 = vmax.f32 %v1996, 0.0
        %v2058 = vmax.f32 %v1999, 0.0
        %v2059 = vmax.f32 %v2002, 0.0
        %v2060 = vmax.f32 %v2005, 0.0
        %v2061 = vmax.f32 %v2008, 0.0
        %v2062 = vmax.f32 %v2011, 0.0
        %v2063 = vmax.f32 %v2014, 0.0
        %v2064 = vmax.f32 %v2017, 0.0
        %v2065 = vmax.f32 %v2020, 0.0
        %v2066 = vmax.f32 %v2023, 0.0
        %v2067 = vmax.f32 %v2026, 0.0
        %v2068 = vmax.f32 %v2029, 0.0
        %v2069 = vmax.f32 %v2032, 0.0
        %v2070 = vmax.f32 %v2035, 0.0
        %v2071 = vmax.f32 %v2038, 0.0
        %2072 = vst [vmem:[%s210] sm:$0xff] %v2040
        %2073 = vst [vmem:[%s210 + $0x8] sm:$0xff] %v2041
        %2074 = vst [vmem:[%s210 + $0x10] sm:$0xff] %v2042
        %2075 = vst [vmem:[%s210 + $0x18] sm:$0xff] %v2043
        %2076 = vst [vmem:[%s210 + $0x20] sm:$0xff] %v2044
        %2077 = vst [vmem:[%s210 + $0x28] sm:$0xff] %v2045
        %2078 = vst [vmem:[%s210 + $0x30] sm:$0xff] %v2046
        %2079 = vst [vmem:[%s210 + $0x38] sm:$0xff] %v2047
        %2080 = vst [vmem:[%s210 + $0x40] sm:$0xff] %v2048
        %2081 = vst [vmem:[%s210 + $0x48] sm:$0xff] %v2049
        %2082 = vst [vmem:[%s210 + $0x50] sm:$0xff] %v2050
        %2083 = vst [vmem:[%s210 + $0x58] sm:$0xff] %v2051
        %2084 = vst [vmem:[%s210 + $0x60] sm:$0xff] %v2052
        %2085 = vst [vmem:[%s210 + $0x68] sm:$0xff] %v2053
        %2086 = vst [vmem:[%s210 + $0x70] sm:$0xff] %v2054
        %2087 = vst [vmem:[%s210 + $0x78] sm:$0xff] %v2055
        %2088 = vst [vmem:[%s210 + $0x80] sm:$0xff] %v2056
        %2089 = vst [vmem:[%s210 + $0x88] sm:$0xff] %v2057
        %2090 = vst [vmem:[%s210 + $0x90] sm:$0xff] %v2058
        %2091 = vst [vmem:[%s210 + $0x98] sm:$0xff] %v2059
        %2092 = vst [vmem:[%s210 + $0xa0] sm:$0xff] %v2060
        %2093 = vst [vmem:[%s210 + $0xa8] sm:$0xff] %v2061
        %2094 = vst [vmem:[%s210 + $0xb0] sm:$0xff] %v2062
        %2095 = vst [vmem:[%s210 + $0xb8] sm:$0xff] %v2063
        %2096 = vst [vmem:[%s210 + $0xc0] sm:$0xff] %v2064
        %2097 = vst [vmem:[%s210 + $0xc8] sm:$0xff] %v2065
        %2098 = vst [vmem:[%s210 + $0xd0] sm:$0xff] %v2066
        %2099 = vst [vmem:[%s210 + $0xd8] sm:$0xff] %v2067
        %2100 = vst [vmem:[%s210 + $0xe0] sm:$0xff] %v2068
        %2101 = vst [vmem:[%s210 + $0xe8] sm:$0xff] %v2069
        %2102 = vst [vmem:[%s210 + $0xf0] sm:$0xff] %v2070
        %2103 = vst [vmem:[%s210 + $0xf8] sm:$0xff] %v2071
        %s2104 = sand.u32 %s126, 1
        %s2105 = scalar_lea.sflag [#allocation4], %s2104
        %s2106 = sand.u32 %s126, 1
        %s2107 = smul.addr %s2106, 256
        %s2108 = scalar_lea.vmem [#allocation3], %s2107
        // Predicated region
        $region33: #{tpu_custom_call.1} parent=31 // pred_check
          %p2109 = pneg %p136
        $region34: #{tpu_custom_call.1} parent=31 // pred_check_branch
          %2111 = sbr.rel (%p2109) target = $region36
        $region35: #{tpu_custom_call.1} parent=31 // pred_region
          %s2112 = smul.u32 32, %s24
          %2114 = vsyncadd %s2105, 0
          %s2115 = sadd.s32 %s23, %s2112
          %s2116 = smul.addr %s22, 32
          %s2117 = sadd.s32 %s2115, %s2116
          %s2118 = smul.addr %s2117, 8
          %s2119 = scalar_lea.hbm %s3, %s2118
          %s2120 = sshll.u32 %s2108, 4
          %s2121 = int_to_ptr.vmem [resolvable:$true] %s2120
          %s2122 = sshll.u32 %s2119, 4
          %s2123 = int_to_ptr.hbm [resolvable:$true] %s2122
          %2128 = dma.vmem_to_hbm [thread:$0]  %s2121, 4096, %s2123, %s2105, 128, 128, 8
        $region36: #{tpu_custom_call.1} parent=31 // pred_fallthru
          _
      $region32: #{tpu_custom_call.1} parent=5 // pred_fallthru
        _
      %p2129 = scmp.le.s32.totalorder 2, %s12
      // Predicated region
      $region37: #{tpu_custom_call.1} parent=5 // pred_check
        %p2130 = pneg %p2129
      $region38: #{tpu_custom_call.1} parent=5 // pred_check_branch
        %2132 = sbr.rel (%p2130) target = $region40
      $region39: #{tpu_custom_call.1} parent=5 // pred_region
        %s2133 = ssub.s32 %s12, 2
        // Predicated region
        $region41: #{tpu_custom_call.1} parent=39 // pred_check
          %p2134 = pneg %p142
        $region42: #{tpu_custom_call.1} parent=39 // pred_check_branch
          %2136 = sbr.rel (%p2134) target = $region44
        $region43: #{tpu_custom_call.1} parent=39 // pred_region
          %s2137 = sand.u32 %s127, 1
          %s2138 = scalar_lea.sflag [#allocation4], %s2137
          %s2139 = sand.u32 %s127, 1
          %s2140 = smul.addr %s2139, 256
          %s2141 = scalar_lea.vmem [#allocation3], %s2140
          %2143 = dma.done %s2138, 4096
        $region44: #{tpu_custom_call.1} parent=39 // pred_fallthru
          _
      $region40: #{tpu_custom_call.1} parent=5 // pred_fallthru
        _
    $region6: #{tpu_custom_call.1} parent=1 // loop_footer
      %s16 = sadd.s32 1, %s12
    $region7: #{tpu_custom_call.1} parent=1 // loop_footer_branch
      %11 = sbr.rel target = $region3
    $region8: #{tpu_custom_call.1} parent=1 // loop_exit
      _
    %2144 = vsyncpa [#allocation4], 1
    %s2145 = scalar_lea.sflag [#allocation4], 1
    %2146 = vsyncpa %s2145, 1

</llo_original>
